<compile_context>
chip_gen: v5e
topology: v5e:2x2
jax: 0.10.0
libtpu: 0.0.40
codegen_flags: <defaults>
</compile_context>

<pallas_src>
import functools

import jax
import jax.numpy as jnp
from jax import lax
from jax.experimental import pallas as pl
from jax.experimental.pallas import tpu as pltpu


def _s4d_kernel(pcol_ref, prow_ref, rmat_ref, u_ref, y_ref,
                w_scr, g2_scr, f_scr, s_scr):
    """One grid step = (head h, sequence tile lt).

    Block shapes:
      pcol_ref : (1, 2*N2, 5)  lanes [dtA_re, dtA_im, alpha, beta, D]
                 (modes duplicated: first N2 rows = "real" copy, last N2 =
                  "imag" copy; alpha/beta fold the 2Re(BC)/-2Im(BC) weights and
                  the re/im selection so every rank-2*N2 factor is one
                  vectorised expression -> one fused MXU matmul, no concat)
      prow_ref : (1, 4, 2*N2)  rows [dtA_re, dtA_im, sel_re, sel_im]
      rmat_ref : (1, 2*N2, 2*N2) per-head state-decay matrix (s @ R == complex
                 multiply by exp(dtA * TL) in real form)
      u_ref    : (1, B, TL)    bf16 input tile
      y_ref    : (1, B, TL)    f32 output tile
    Scratch (persists across one head's lt sweep, rebuilt at lt == 0):
      w_scr  : (TL, TL)   bf16  causal intra-tile Toeplitz block W[i,j]=K[j-i]
      g2_scr : (2*N2, TL) f32   inter-tile apply factor
      f_scr  : (TL, 2*N2) bf16  state-update factor (exponents <= 0)
      s_scr  : (B, 2*N2)  f32   carried per-mode state [Re S | Im S]
    """
    TL = y_ref.shape[2]
    lt = pl.program_id(1)

    # ---- once-per-head prologue: build tile-invariant factors ----
    @pl.when(lt == 0)
    def _build_per_head_constants():
        pc = pcol_ref[0]                            # (2N2, 5)
        a_c, w_c = pc[:, 0:1], pc[:, 1:2]           # (2N2, 1)
        alpha, beta = pc[:, 2:3], pc[:, 3:4]
        pr = prow_ref[0]                            # (4, 2N2)
        a_r, w_r = pr[0:1, :], pr[1:2, :]           # (1, 2N2)
        sel_re, sel_im = pr[2:3, :], pr[3:4, :]

        j = lax.broadcasted_iota(jnp.int32, (1, TL), 1).astype(jnp.float32)
        i = lax.broadcasted_iota(jnp.int32, (TL, 1), 0).astype(jnp.float32)

        def col_factor(t):                          # t: (1, TL) -> (2N2, TL)
            e = jnp.exp(a_c * t)
            return e * (alpha * jnp.cos(w_c * t) + beta * jnp.sin(w_c * t))

        def row_factor(t):                          # t: (TL, 1) -> (TL, 2N2)
            e = jnp.exp(t * a_r)
            return e * (sel_re * jnp.cos(t * w_r) + sel_im * jnp.sin(t * w_r))

        # Inter-tile apply factor G2[k, j] = [2Re ; -2Im](BC exp(dtA * j)).
        g2_scr[...] = col_factor(j)
        # State-update factor F[i, k] = [Re | Im] exp(dtA (TL - i)); TL-i >= 1
        # so every exponent is <= 0 (no overflow/clamp by construction).
        f_scr[...] = row_factor(jnp.float32(TL) - i).astype(f_scr.dtype)

        # Intra-tile causal Toeplitz block via ONE fused rank-2*N2 f32 matmul.
        # Exponents re-centred at c = TL // 2 -> |Re exponent| <= |dtA_re|*TL/2,
        # bounded by the tile size (independent of L).
        c = jnp.float32(TL // 2)
        lhs = row_factor(c - i)                     # (TL, 2N2)
        rhs = col_factor(j - c)                     # (2N2, TL)
        w_full = jnp.dot(lhs, rhs, preferred_element_type=jnp.float32)
        # Fixed (TL, TL) causal triangle; mask in f32 BEFORE the bf16 cast so
        # non-causal garbage never reaches the bf16 apply matmul.
        w_scr[...] = jnp.where(j >= i, w_full, 0.0).astype(w_scr.dtype)

        # Reset the carried inter-tile state at the start of each head.
        s_scr[...] = jnp.zeros_like(s_scr)

    # ---- per-tile work ----
    u_bf = u_ref[0]                                 # (B, TL) bf16
    s = s_scr[...]                                  # (B, 2N2) f32
    d_h = pcol_ref[0][0:1, 4:5]                     # (1, 1)  D skip weight

    # Intra-tile causal conv on the MXU (K = TL contraction) + contribution of
    # everything before this tile via the carried state.
    y = jnp.dot(u_bf, w_scr[...], preferred_element_type=jnp.float32)
    y = y + jnp.dot(s, g2_scr[...], preferred_element_type=jnp.float32)
    y_ref[0] = (y + d_h * u_bf.astype(jnp.float32)).astype(y_ref.dtype)

    # State carry for the next tile:  s <- s @ R  +  u_tile @ F.
    s_scr[...] = (jnp.dot(s, rmat_ref[0], preferred_element_type=jnp.float32)
                  + jnp.dot(u_bf, f_scr[...], preferred_element_type=jnp.float32))


def _pack_params(log_delta, log_A_real, A_imag, C_re, C_im, D, tl):
    """Tiny O(H*N2) discretisation prologue + duplicated-mode packing."""
    H, N2 = log_A_real.shape
    dt = jnp.exp(log_delta.reshape(H, 1)).astype(jnp.float32)
    A = (-jnp.exp(log_A_real) + 1j * A_imag).astype(jnp.complex64)
    dtA = A * dt
    BC = (C_re + 1j * C_im).astype(jnp.complex64) * (jnp.exp(dtA) - 1.0) / A
    a = jnp.real(dtA).astype(jnp.float32)            # <= 0
    w = jnp.imag(dtA).astype(jnp.float32)
    br2 = 2.0 * jnp.real(BC).astype(jnp.float32)
    bi2 = 2.0 * jnp.imag(BC).astype(jnp.float32)

    ones, zeros = jnp.ones_like(a), jnp.zeros_like(a)
    a2 = jnp.concatenate([a, a], axis=1)             # (H, 2N2)
    w2 = jnp.concatenate([w, w], axis=1)
    alpha = jnp.concatenate([br2, -bi2], axis=1)     # fused re / -im weights
    beta = jnp.concatenate([-bi2, -br2], axis=1)
    sel_re = jnp.concatenate([ones, zeros], axis=1)
    sel_im = jnp.concatenate([zeros, ones], axis=1)
    d2 = jnp.broadcast_to(D.reshape(H, 1).astype(jnp.float32), (H, 2 * N2))

    pcol = jnp.stack([a2, w2, alpha, beta, d2], axis=-1)   # (H, 2N2, 5)
    prow = jnp.stack([a2, w2, sel_re, sel_im], axis=1)     # (H, 4, 2N2)

    # Real form of  s <- exp(dtA * tl) * s :
    #   R = [[diag(rr),  diag(ri)],
    #        [-diag(ri), diag(rr)]]        (state layout [Re S | Im S])
    r = jnp.exp(dtA * tl)
    rr = jnp.real(r).astype(jnp.float32)
    ri = jnp.imag(r).astype(jnp.float32)
    eye = jnp.eye(N2, dtype=jnp.float32)
    dr = rr[:, :, None] * eye
    di = ri[:, :, None] * eye
    r_mat = jnp.concatenate(
        [jnp.concatenate([dr, di], axis=2),
         jnp.concatenate([-di, dr], axis=2)], axis=1)      # (H, 2N2, 2N2)
    return pcol, prow, r_mat


def s4d_forward_hbl(u_hbl, log_delta, log_A_real, A_imag, C_re, C_im, D,
                    *, max_tile_l=512):
    """Head-major S4D forward: u_hbl (H, B, L) -> (H, B, L) float32.

    Prefer this entry point when stacking layers (avoids the
    (B,L,H) <-> (H,B,L) HBM transposes).  Per-step VMEM is O(max_tile_l^2),
    independent of L; 512 (default) is safe on v5e/v6e/v7x, 1024 is fine on
    v5e/v6e.  For best MXU/store utilisation run B as a multiple of 8.
    """
    H, B, L = u_hbl.shape
    N2 = log_A_real.shape[-1]

    if L <= max_tile_l:
        tl, l_pad = L, L                    # single tile: full-dim block
    else:
        assert max_tile_l % 128 == 0, "sequence tile must be a multiple of 128"
        tl = max_tile_l
        l_pad = -(-L // tl) * tl
    n_lt = l_pad // tl

    pcol, prow, r_mat = _pack_params(log_delta, log_A_real, A_imag,
                                     C_re, C_im, D, tl)

    # bf16 activations into the kernel (halves input DMA + VMEM); accumulation
    # stays f32.  Skip the pad pass when L is already tile-aligned.
    u_bf = u_hbl.astype(jnp.bfloat16)
    if l_pad != L:
        # Zero-padding the tail of L does not change causal outputs for l < L.
        u_bf = jnp.pad(u_bf, ((0, 0), (0, 0), (0, l_pad - L)))

    y_pad = pl.pallas_call(
        _s4d_kernel,
        out_shape=jax.ShapeDtypeStruct((H, B, l_pad), jnp.float32),
        grid=(H, n_lt),
        in_specs=[
            pl.BlockSpec((1, 2 * N2, 5), lambda h, lt: (h, 0, 0)),
            pl.BlockSpec((1, 4, 2 * N2), lambda h, lt: (h, 0, 0)),
            pl.BlockSpec((1, 2 * N2, 2 * N2), lambda h, lt: (h, 0, 0)),
            pl.BlockSpec((1, B, tl), lambda h, lt: (h, 0, lt)),
        ],
        out_specs=pl.BlockSpec((1, B, tl), lambda h, lt: (h, 0, lt)),
        scratch_shapes=[
            pltpu.VMEM((tl, tl), jnp.bfloat16),        # W_intra (causal block)
            pltpu.VMEM((2 * N2, tl), jnp.float32),     # G2 (inter-tile apply)
            pltpu.VMEM((tl, 2 * N2), jnp.bfloat16),    # F  (state update)
            pltpu.VMEM((B, 2 * N2), jnp.float32),      # carried state
        ],
        compiler_params=pltpu.CompilerParams(
            # Megacore split lands on heads; lt must stay sequential for the
            # carried state and the once-per-head scratch build.
            dimension_semantics=("parallel", "arbitrary"),
            vmem_limit_bytes=40 * 1024 * 1024,
        ),
    )(pcol, prow, r_mat, u_bf)

    return y_pad[:, :, :L]


@functools.partial(jax.jit, static_argnames=("max_tile_l",))
def s4d_forward(u, log_delta, log_A_real, A_imag, C_re, C_im, D,
                *, max_tile_l=512):
    """Drop-in layout of the PyTorch module: u (B, L, H) -> (B, L, H)."""
    u_hbl = jnp.transpose(u, (2, 0, 1))                       # (H, B, L)
    y_hbl = s4d_forward_hbl(u_hbl, log_delta, log_A_real, A_imag,
                            C_re, C_im, D, max_tile_l=max_tile_l)
    return jnp.transpose(y_hbl, (1, 2, 0))                    # (B, L, H)


def s4d_reference(u, log_delta, log_A_real, A_imag, C_re, C_im, D):
    """Pure-JAX reference: direct causal convolution, mathematically identical
    to the module's rfft(n=2L) path (linear conv of two length-L signals,
    truncated to the first L samples)."""
    B, L, H = u.shape
    dt = jnp.exp(log_delta)                                   # (H, 1)
    C = C_re + 1j * C_im
    A = -jnp.exp(log_A_real) + 1j * A_imag
    dtA = A * dt
    t = jnp.arange(L)
    K = 2.0 * jnp.real(jnp.einsum(
        'hn,hnl->hl', C * (jnp.exp(dtA) - 1.0) / A,
        jnp.exp(dtA[:, :, None] * t)))                        # (H, L)
    idx = t[:, None] - t[None, :]                             # (L, L): l - m
    T = jnp.where(idx >= 0, K[:, jnp.clip(idx, 0, L - 1)], 0.0)  # (H, L, L)
    y = jnp.einsum('hlm,bmh->blh', T, u)
    return y + u * D[None, None, :]


if __name__ == "__main__":
    # Small shapes consistent with the module: H hidden channels, N state size.
    B, H, N = 2, 8, 8
    N2 = N // 2
    dt_min, dt_max = 0.001, 0.1

    key = jax.random.PRNGKey(0)
    k_ld, k_cr, k_ci, k_d, k_u1, k_u2 = jax.random.split(key, 6)

    # Deterministic parameter init mirroring S4DLayer.__init__ (zoh path).
    log_delta = (jax.random.uniform(k_ld, (H, 1), dtype=jnp.float32)
                 * (jnp.log(dt_max) - jnp.log(dt_min)) + jnp.log(dt_min))
    log_A_real = jnp.log(0.5 * jnp.ones((H, N2), dtype=jnp.float32))
    A_imag = jnp.pi * jnp.broadcast_to(
        jnp.arange(N2, dtype=jnp.float32), (H, N2))
    # C ~ complex normal (real/imag each var 0.5, like torch.randn cfloat)
    C_re = jax.random.normal(k_cr, (H, N2), dtype=jnp.float32) / jnp.sqrt(2.0)
    C_im = jax.random.normal(k_ci, (H, N2), dtype=jnp.float32) / jnp.sqrt(2.0)
    D = jax.random.normal(k_d, (H,), dtype=jnp.float32)

    def check(u, max_tile_l):
        y = s4d_forward(u, log_delta, log_A_real, A_imag, C_re, C_im, D,
                        max_tile_l=max_tile_l)
        y = jax.block_until_ready(y)
        y_ref = s4d_reference(u, log_delta, log_A_real, A_imag, C_re, C_im, D)
        assert y.shape == u.shape
        # Tolerance covers bf16 activations / bf16 Toeplitz operands (f32
        # accumulation) vs the f32 reference; structural bugs are O(0.1-1).
        scale = float(jnp.max(jnp.abs(y_ref)))
        err = float(jnp.max(jnp.abs(y - y_ref)))
        assert err <= 5e-2 + 1e-2 * scale, (
            "mismatch vs reference: max abs err = %g (scale %g)" % (err, scale))

    # Single-tile path (L <= tile): drop-in small shape.
    check(jax.random.normal(k_u1, (B, 16, H), dtype=jnp.float32), 512)
    # Multi-tile chunked-scan path with a ragged tail (L=320, 3 tiles of 128):
    # exercises the carried state, per-head scratch reuse and padding.
    check(jax.random.normal(k_u2, (B, 320, H), dtype=jnp.float32), 128)

    print("KERNEL_OK")
</pallas_src>

<mosaic_0001>
module attributes {stable_mosaic.version = 11 : i64} {
  func.func @_s4d_kernel(%arg0: i32, %arg1: i32, %arg2: memref<1x8x5xf32, #tpu.memory_space<vmem>>, %arg3: memref<1x4x8xf32, #tpu.memory_space<vmem>>, %arg4: memref<1x8x8xf32, #tpu.memory_space<vmem>>, %arg5: memref<1x2x16xbf16, #tpu.memory_space<vmem>>, %arg6: memref<1x2x16xf32, #tpu.memory_space<vmem>>, %arg7: memref<16x16xbf16, #tpu.memory_space<vmem>>, %arg8: memref<8x16xf32, #tpu.memory_space<vmem>>, %arg9: memref<16x8xbf16, #tpu.memory_space<vmem>>, %arg10: memref<2x8xf32, #tpu.memory_space<vmem>>) attributes {dimension_semantics = [#tpu.dimension_semantics<parallel>, #tpu.dimension_semantics<arbitrary>], iteration_bounds = array<i64: 8, 1>, scalar_prefetch = 0 : i64, scratch_operands = 4 : i64, tpu.core_type = #tpu.core_type<tc>, window_params = [{transform_indices = @transform_0, window_bounds = array<i64: 1, 8, 5>}, {transform_indices = @transform_1, window_bounds = array<i64: 1, 4, 8>}, {transform_indices = @transform_2, window_bounds = array<i64: 1, 8, 8>}, {transform_indices = @transform_3, window_bounds = array<i64: 1, 2, 16>}, {transform_indices = @transform_4, window_bounds = array<i64: 1, 2, 16>}]} {
    %c0_i32 = arith.constant 0 : i32
    %0 = arith.cmpi eq, %arg1, %c0_i32 : i32
    %1 = arith.extui %0 : i1 to i32
    %c0_i32_0 = arith.constant 0 : i32
    %2 = arith.cmpi ne, %1, %c0_i32_0 : i32
    scf.if %2 {
      %c0_25 = arith.constant 0 : index
      %c0_26 = arith.constant 0 : index
      %c0_27 = arith.constant 0 : index
      %28 = vector.load %arg2[%c0_25, %c0_26, %c0_27] : memref<1x8x5xf32, #tpu.memory_space<vmem>>, vector<1x8x5xf32>
      %29 = vector.shape_cast %28 : vector<1x8x5xf32> to vector<8x5xf32>
      %30 = vector.extract_strided_slice %29 {offsets = [0, 0], sizes = [8, 1], strides = [1, 1]} : vector<8x5xf32> to vector<8x1xf32>
      %31 = vector.extract_strided_slice %29 {offsets = [0, 1], sizes = [8, 1], strides = [1, 1]} : vector<8x5xf32> to vector<8x1xf32>
      %32 = vector.extract_strided_slice %29 {offsets = [0, 2], sizes = [8, 1], strides = [1, 1]} : vector<8x5xf32> to vector<8x1xf32>
      %33 = vector.extract_strided_slice %29 {offsets = [0, 3], sizes = [8, 1], strides = [1, 1]} : vector<8x5xf32> to vector<8x1xf32>
      %c0_28 = arith.constant 0 : index
      %c0_29 = arith.constant 0 : index
      %c0_30 = arith.constant 0 : index
      %34 = vector.load %arg3[%c0_28, %c0_29, %c0_30] : memref<1x4x8xf32, #tpu.memory_space<vmem>>, vector<1x4x8xf32>
      %35 = vector.shape_cast %34 : vector<1x4x8xf32> to vector<4x8xf32>
      %36 = vector.extract_strided_slice %35 {offsets = [0, 0], sizes = [1, 8], strides = [1, 1]} : vector<4x8xf32> to vector<1x8xf32>
      %37 = vector.extract_strided_slice %35 {offsets = [1, 0], sizes = [1, 8], strides = [1, 1]} : vector<4x8xf32> to vector<1x8xf32>
      %38 = vector.extract_strided_slice %35 {offsets = [2, 0], sizes = [1, 8], strides = [1, 1]} : vector<4x8xf32> to vector<1x8xf32>
      %39 = vector.extract_strided_slice %35 {offsets = [3, 0], sizes = [1, 8], strides = [1, 1]} : vector<4x8xf32> to vector<1x8xf32>
      %40 = tpu.iota {dimensions = array<i32: 1>} : vector<1x16xi32>
      %41 = arith.sitofp %40 : vector<1x16xi32> to vector<1x16xf32>
      %42 = tpu.iota {dimensions = array<i32: 0>} : vector<16x1xi32>
      %43 = arith.sitofp %42 : vector<16x1xi32> to vector<16x1xf32>
      %44 = vector.broadcast %30 : vector<8x1xf32> to vector<8x16xf32>
      %45 = vector.broadcast %41 : vector<1x16xf32> to vector<8x16xf32>
      %46 = arith.mulf %44, %45 : vector<8x16xf32>
      %47 = math.exp %46 : vector<8x16xf32>
      %48 = vector.broadcast %31 : vector<8x1xf32> to vector<8x16xf32>
      %49 = vector.broadcast %41 : vector<1x16xf32> to vector<8x16xf32>
      %50 = arith.mulf %48, %49 : vector<8x16xf32>
      %51 = math.cos %50 : vector<8x16xf32>
      %52 = vector.broadcast %32 : vector<8x1xf32> to vector<8x16xf32>
      %53 = arith.mulf %52, %51 : vector<8x16xf32>
      %54 = vector.broadcast %31 : vector<8x1xf32> to vector<8x16xf32>
      %55 = vector.broadcast %41 : vector<1x16xf32> to vector<8x16xf32>
      %56 = arith.mulf %54, %55 : vector<8x16xf32>
      %57 = math.sin %56 : vector<8x16xf32>
      %58 = vector.broadcast %33 : vector<8x1xf32> to vector<8x16xf32>
      %59 = arith.mulf %58, %57 : vector<8x16xf32>
      %60 = arith.addf %53, %59 : vector<8x16xf32>
      %61 = arith.mulf %47, %60 : vector<8x16xf32>
      %c0_31 = arith.constant 0 : index
      %c0_32 = arith.constant 0 : index
      %62 = vector.load %arg8[%c0_31, %c0_32] : memref<8x16xf32, #tpu.memory_space<vmem>>, vector<8x16xf32>
      tpu.vector_store %arg8[%c0_31, %c0_32], %61 {strides = array<i32>} : memref<8x16xf32, #tpu.memory_space<vmem>>, vector<8x16xf32>,
      %cst_33 = arith.constant 1.600000e+01 : f32
      %63 = vector.broadcast %cst_33 : f32 to vector<16x1xf32>
      %64 = arith.subf %63, %43 : vector<16x1xf32>
      %65 = vector.broadcast %64 : vector<16x1xf32> to vector<16x8xf32>
      %66 = vector.broadcast %36 : vector<1x8xf32> to vector<16x8xf32>
      %67 = arith.mulf %65, %66 : vector<16x8xf32>
      %68 = math.exp %67 : vector<16x8xf32>
      %69 = vector.broadcast %64 : vector<16x1xf32> to vector<16x8xf32>
      %70 = vector.broadcast %37 : vector<1x8xf32> to vector<16x8xf32>
      %71 = arith.mulf %69, %70 : vector<16x8xf32>
      %72 = math.cos %71 : vector<16x8xf32>
      %73 = vector.broadcast %38 : vector<1x8xf32> to vector<16x8xf32>
      %74 = arith.mulf %73, %72 : vector<16x8xf32>
      %75 = vector.broadcast %64 : vector<16x1xf32> to vector<16x8xf32>
      %76 = vector.broadcast %37 : vector<1x8xf32> to vector<16x8xf32>
      %77 = arith.mulf %75, %76 : vector<16x8xf32>
      %78 = math.sin %77 : vector<16x8xf32>
      %79 = vector.broadcast %39 : vector<1x8xf32> to vector<16x8xf32>
      %80 = arith.mulf %79, %78 : vector<16x8xf32>
      %81 = arith.addf %74, %80 : vector<16x8xf32>
      %82 = arith.mulf %68, %81 : vector<16x8xf32>
      %83 = arith.truncf %82 : vector<16x8xf32> to vector<16x8xbf16>
      %c0_34 = arith.constant 0 : index
      %c0_35 = arith.constant 0 : index
      %84 = vector.load %arg9[%c0_34, %c0_35] : memref<16x8xbf16, #tpu.memory_space<vmem>>, vector<16x8xbf16>
      tpu.vector_store %arg9[%c0_34, %c0_35], %83 {strides = array<i32>} : memref<16x8xbf16, #tpu.memory_space<vmem>>, vector<16x8xbf16>,
      %cst_36 = arith.constant 8.000000e+00 : f32
      %85 = vector.broadcast %cst_36 : f32 to vector<16x1xf32>
      %86 = arith.subf %85, %43 : vector<16x1xf32>
      %87 = vector.broadcast %86 : vector<16x1xf32> to vector<16x8xf32>
      %88 = vector.broadcast %36 : vector<1x8xf32> to vector<16x8xf32>
      %89 = arith.mulf %87, %88 : vector<16x8xf32>
      %90 = math.exp %89 : vector<16x8xf32>
      %91 = vector.broadcast %86 : vector<16x1xf32> to vector<16x8xf32>
      %92 = vector.broadcast %37 : vector<1x8xf32> to vector<16x8xf32>
      %93 = arith.mulf %91, %92 : vector<16x8xf32>
      %94 = math.cos %93 : vector<16x8xf32>
      %95 = vector.broadcast %38 : vector<1x8xf32> to vector<16x8xf32>
      %96 = arith.mulf %95, %94 : vector<16x8xf32>
      %97 = vector.broadcast %86 : vector<16x1xf32> to vector<16x8xf32>
      %98 = vector.broadcast %37 : vector<1x8xf32> to vector<16x8xf32>
      %99 = arith.mulf %97, %98 : vector<16x8xf32>
      %100 = math.sin %99 : vector<16x8xf32>
      %101 = vector.broadcast %39 : vector<1x8xf32> to vector<16x8xf32>
      %102 = arith.mulf %101, %100 : vector<16x8xf32>
      %103 = arith.addf %96, %102 : vector<16x8xf32>
      %104 = arith.mulf %90, %103 : vector<16x8xf32>
      %cst_37 = arith.constant 8.000000e+00 : f32
      %105 = vector.broadcast %cst_37 : f32 to vector<1x16xf32>
      %106 = arith.subf %41, %105 : vector<1x16xf32>
      %107 = vector.broadcast %30 : vector<8x1xf32> to vector<8x16xf32>
      %108 = vector.broadcast %106 : vector<1x16xf32> to vector<8x16xf32>
      %109 = arith.mulf %107, %108 : vector<8x16xf32>
      %110 = math.exp %109 : vector<8x16xf32>
      %111 = vector.broadcast %31 : vector<8x1xf32> to vector<8x16xf32>
      %112 = vector.broadcast %106 : vector<1x16xf32> to vector<8x16xf32>
      %113 = arith.mulf %111, %112 : vector<8x16xf32>
      %114 = math.cos %113 : vector<8x16xf32>
      %115 = vector.broadcast %32 : vector<8x1xf32> to vector<8x16xf32>
      %116 = arith.mulf %115, %114 : vector<8x16xf32>
      %117 = vector.broadcast %31 : vector<8x1xf32> to vector<8x16xf32>
      %118 = vector.broadcast %106 : vector<1x16xf32> to vector<8x16xf32>
      %119 = arith.mulf %117, %118 : vector<8x16xf32>
      %120 = math.sin %119 : vector<8x16xf32>
      %121 = vector.broadcast %33 : vector<8x1xf32> to vector<8x16xf32>
      %122 = arith.mulf %121, %120 : vector<8x16xf32>
      %123 = arith.addf %116, %122 : vector<8x16xf32>
      %124 = arith.mulf %110, %123 : vector<8x16xf32>
      %cst_38 = arith.constant dense<0.000000e+00> : vector<16x16xf32>
      %125 = tpu.matmul %104, %124, %cst_38 {dimension_numbers = #tpu.dot_dimension_numbers<[1], [0], [0], [1], [0, 0, 1, 1], [], []>} : vector<16x8xf32>, vector<8x16xf32>, vector<16x16xf32> -> vector<16x16xf32>
      %126 = vector.broadcast %41 : vector<1x16xf32> to vector<16x16xf32>
      %127 = vector.broadcast %43 : vector<16x1xf32> to vector<16x16xf32>
      %128 = arith.cmpf oge, %126, %127 : vector<16x16xf32>
      %cst_39 = arith.constant 0.000000e+00 : f32
      %129 = vector.broadcast %cst_39 : f32 to vector<16x16xf32>
      %130 = arith.select %128, %125, %129 : vector<16x16xi1>, vector<16x16xf32>
      %131 = arith.truncf %130 : vector<16x16xf32> to vector<16x16xbf16>
      %c0_40 = arith.constant 0 : index
      %c0_41 = arith.constant 0 : index
      %132 = vector.load %arg7[%c0_40, %c0_41] : memref<16x16xbf16, #tpu.memory_space<vmem>>, vector<16x16xbf16>
      tpu.vector_store %arg7[%c0_40, %c0_41], %131 {strides = array<i32>} : memref<16x16xbf16, #tpu.memory_space<vmem>>, vector<16x16xbf16>,
      %cst_42 = arith.constant 0.000000e+00 : f32
      %133 = vector.broadcast %cst_42 : f32 to vector<2x8xf32>
      %c0_43 = arith.constant 0 : index
      %c0_44 = arith.constant 0 : index
      %134 = vector.load %arg10[%c0_43, %c0_44] : memref<2x8xf32, #tpu.memory_space<vmem>>, vector<2x8xf32>
      tpu.vector_store %arg10[%c0_43, %c0_44], %133 {strides = array<i32>} : memref<2x8xf32, #tpu.memory_space<vmem>>, vector<2x8xf32>,
    } else {
    }
    %c0 = arith.constant 0 : index
    %c0_1 = arith.constant 0 : index
    %c0_2 = arith.constant 0 : index
    %3 = vector.load %arg5[%c0, %c0_1, %c0_2] : memref<1x2x16xbf16, #tpu.memory_space<vmem>>, vector<1x2x16xbf16>
    %4 = vector.shape_cast %3 : vector<1x2x16xbf16> to vector<2x16xbf16>
    %c0_3 = arith.constant 0 : index
    %c0_4 = arith.constant 0 : index
    %5 = vector.load %arg10[%c0_3, %c0_4] : memref<2x8xf32, #tpu.memory_space<vmem>>, vector<2x8xf32>
    %c0_5 = arith.constant 0 : index
    %c0_6 = arith.constant 0 : index
    %c0_7 = arith.constant 0 : index
    %6 = vector.load %arg2[%c0_5, %c0_6, %c0_7] : memref<1x8x5xf32, #tpu.memory_space<vmem>>, vector<1x8x5xf32>
    %7 = vector.shape_cast %6 : vector<1x8x5xf32> to vector<8x5xf32>
    %8 = vector.extract_strided_slice %7 {offsets = [0, 4], sizes = [1, 1], strides = [1, 1]} : vector<8x5xf32> to vector<1x1xf32>
    %c0_8 = arith.constant 0 : index
    %c0_9 = arith.constant 0 : index
    %9 = vector.load %arg7[%c0_8, %c0_9] : memref<16x16xbf16, #tpu.memory_space<vmem>>, vector<16x16xbf16>
    %cst = arith.constant dense<0.000000e+00> : vector<2x16xf32>
    %10 = tpu.matmul %4, %9, %cst {dimension_numbers = #tpu.dot_dimension_numbers<[1], [0], [0], [1], [0, 0, 1, 1], [], []>} : vector<2x16xbf16>, vector<16x16xbf16>, vector<2x16xf32> -> vector<2x16xf32>
    %c0_10 = arith.constant 0 : index
    %c0_11 = arith.constant 0 : index
    %11 = vector.load %arg8[%c0_10, %c0_11] : memref<8x16xf32, #tpu.memory_space<vmem>>, vector<8x16xf32>
    %cst_12 = arith.constant dense<0.000000e+00> : vector<2x16xf32>
    %12 = tpu.matmul %5, %11, %cst_12 {dimension_numbers = #tpu.dot_dimension_numbers<[1], [0], [0], [1], [0, 0, 1, 1], [], []>} : vector<2x8xf32>, vector<8x16xf32>, vector<2x16xf32> -> vector<2x16xf32>
    %13 = arith.addf %10, %12 : vector<2x16xf32>
    %14 = arith.extf %4 : vector<2x16xbf16> to vector<2x16xf32>
    %15 = vector.broadcast %8 : vector<1x1xf32> to vector<2x16xf32>
    %16 = arith.mulf %15, %14 : vector<2x16xf32>
    %17 = arith.addf %13, %16 : vector<2x16xf32>
    %c0_13 = arith.constant 0 : index
    %c0_14 = arith.constant 0 : index
    %c0_15 = arith.constant 0 : index
    %18 = vector.load %arg6[%c0_13, %c0_14, %c0_15] : memref<1x2x16xf32, #tpu.memory_space<vmem>>, vector<1x2x16xf32>
    %19 = vector.shape_cast %18 : vector<1x2x16xf32> to vector<2x16xf32>
    %20 = vector.shape_cast %17 : vector<2x16xf32> to vector<1x2x16xf32>
    tpu.vector_store %arg6[%c0_13, %c0_14, %c0_15], %20 {strides = array<i32>} : memref<1x2x16xf32, #tpu.memory_space<vmem>>, vector<1x2x16xf32>,
    %c0_16 = arith.constant 0 : index
    %c0_17 = arith.constant 0 : index
    %c0_18 = arith.constant 0 : index
    %21 = vector.load %arg4[%c0_16, %c0_17, %c0_18] : memref<1x8x8xf32, #tpu.memory_space<vmem>>, vector<1x8x8xf32>
    %22 = vector.shape_cast %21 : vector<1x8x8xf32> to vector<8x8xf32>
    %cst_19 = arith.constant dense<0.000000e+00> : vector<2x8xf32>
    %23 = tpu.matmul %5, %22, %cst_19 {dimension_numbers = #tpu.dot_dimension_numbers<[1], [0], [0], [1], [0, 0, 1, 1], [], []>} : vector<2x8xf32>, vector<8x8xf32>, vector<2x8xf32> -> vector<2x8xf32>
    %c0_20 = arith.constant 0 : index
    %c0_21 = arith.constant 0 : index
    %24 = vector.load %arg9[%c0_20, %c0_21] : memref<16x8xbf16, #tpu.memory_space<vmem>>, vector<16x8xbf16>
    %cst_22 = arith.constant dense<0.000000e+00> : vector<2x8xf32>
    %25 = tpu.matmul %4, %24, %cst_22 {dimension_numbers = #tpu.dot_dimension_numbers<[1], [0], [0], [1], [0, 0, 1, 1], [], []>} : vector<2x16xbf16>, vector<16x8xbf16>, vector<2x8xf32> -> vector<2x8xf32>
    %26 = arith.addf %23, %25 : vector<2x8xf32>
    %c0_23 = arith.constant 0 : index
    %c0_24 = arith.constant 0 : index
    %27 = vector.load %arg10[%c0_23, %c0_24] : memref<2x8xf32, #tpu.memory_space<vmem>>, vector<2x8xf32>
    tpu.vector_store %arg10[%c0_23, %c0_24], %26 {strides = array<i32>} : memref<2x8xf32, #tpu.memory_space<vmem>>, vector<2x8xf32>,
    return
  }
  func.func @transform_0(%arg0: i32, %arg1: i32) -> (i32, i32, i32) {
    %c0_i32 = arith.constant 0 : i32
    %c0_i32_0 = arith.constant 0 : i32
    %c0_i32_1 = arith.constant 0 : i32
    return %arg0, %c0_i32, %c0_i32_0 : i32, i32, i32
  }
  func.func @transform_1(%arg0: i32, %arg1: i32) -> (i32, i32, i32) {
    %c0_i32 = arith.constant 0 : i32
    %c0_i32_0 = arith.constant 0 : i32
    %c0_i32_1 = arith.constant 0 : i32
    return %arg0, %c0_i32, %c0_i32_0 : i32, i32, i32
  }
  func.func @transform_2(%arg0: i32, %arg1: i32) -> (i32, i32, i32) {
    %c0_i32 = arith.constant 0 : i32
    %c0_i32_0 = arith.constant 0 : i32
    %c0_i32_1 = arith.constant 0 : i32
    return %arg0, %c0_i32, %c0_i32_0 : i32, i32, i32
  }
  func.func @transform_3(%arg0: i32, %arg1: i32) -> (i32, i32, i32) {
    %c0_i32 = arith.constant 0 : i32
    %c0_i32_0 = arith.constant 0 : i32
    return %arg0, %c0_i32, %arg1 : i32, i32, i32
  }
  func.func @transform_4(%arg0: i32, %arg1: i32) -> (i32, i32, i32) {
    %c0_i32 = arith.constant 0 : i32
    %c0_i32_0 = arith.constant 0 : i32
    return %arg0, %c0_i32, %arg1 : i32, i32, i32
  }
}

</mosaic_0001>

<llo_original>
// kernel: s4d_forward.1
$region0: #{s4d_forward.1}
  #allocation0 [shape = 'u32[]', space=smem, size = 0x4, offset = 0x4, fixed_abs, tag = 'smem constant byte address 0x4 - core index']
  #allocation1 [shape = 'u32[72,128]{1,0:T(1,128)}', space=vmem, size = 0x9000, scoped, tag = 'internal scratch']
  #allocation2 [shape = 'bf16[16,16]{1,0:T(8,128)(2,1)}', space=vmem, size = 0x1000, scoped, tag = 'scratch operand']
  #allocation3 [shape = 'f32[8,16]{1,0:T(8,128)}', space=vmem, size = 0x1000, scoped, tag = 'scratch operand']
  #allocation4 [shape = 'bf16[16,8]{1,0:T(8,128)(2,1)}', space=vmem, size = 0x1000, scoped, tag = 'scratch operand']
  #allocation5 [shape = 'f32[2,8]{1,0:T(2,128)}', space=vmem, size = 0x400, scoped, tag = 'scratch operand']
  %s0 = inlined_call_operand.vmem [shape: f32[8,8,5], index: 0, kind: input, shape index: {}]
  %s1 = inlined_call_operand.vmem [shape: f32[8,4,8], index: 1, kind: input, shape index: {}]
  %s2 = inlined_call_operand.vmem [shape: f32[8,8,8], index: 2, kind: input, shape index: {}]
  %s3 = inlined_call_operand.vmem [shape: bf16[8,2,16], index: 3, kind: input, shape index: {}]
  %s4 = inlined_call_operand.vmem [shape: f32[8,2,16], index: 4, kind: output, shape index: {}]
  %s5 = sld [smem:[#allocation0]]
  $region53: #{s4d_forward.1} parent=0
    _
  %s7 = ssub.s32 1, %s5
  %s8 = scalar_select 0, %s7, %s5
  loop: start=0, step=1, limit=10
  $region2: #{s4d_forward.1} parent=0 // loop_pre_header
    _
  $region3: #{s4d_forward.1} parent=0 // loop_header
    %s10 = sphi 0, %s14
    %p11 = scmp.ge.s32.totalorder %s10, 10
    %s17 = sphi 0, %s29
    %s18 = sphi 0, %s25
    %s19 = sphi 0, %s17
    %s20 = sphi 0, %s18
    %s21 = sphi 0, %s19
    %s22 = sphi 0, %s20
    %s32 = sphi 0, %s34
    %s35 = sphi 0, %s32
    %s36 = sphi 0, %s35
    %s52 = sphi 0, %s36
    %s58 = sphi 0, %s60
    %s61 = sphi 0, %s58
    %s62 = sphi 0, %s61
    %s78 = sphi 0, %s62
    %s84 = sphi 0, %s86
    %s87 = sphi 0, %s84
    %s88 = sphi 0, %s87
    %s104 = sphi 0, %s88
    %s112 = sphi 0, %s114
    %s115 = sphi 0, %s112
    %s116 = sphi 0, %s115
    %s132 = sphi 0, %s116
    %s140 = sphi 0, %s142
    %s143 = sphi 0, %s140
    %s144 = sphi 0, %s143
    %s160 = sphi 0, %s144
  $region4: #{s4d_forward.1} parent=0 // loop_header_branch
    %13 = sbr.rel (%p11) target = $region8
  $region5: #{s4d_forward.1} parent=0 // loop_body
    %s15 = ssub.s32 %s10, 1
    %s16 = ssub.s32 %s10, 2
    %s23 = sadd.s32 1, %s18
    %p24 = scmp.ge.s32.totalorder %s23, 1
    %s25 = scalar_select %p24, 0, %s23
    %s26 = sadd.s32 1, %s17
    %s27 = scalar_select %p24, %s26, %s17
    %p28 = scmp.ge.s32.totalorder %s27, 8
    %s29 = scalar_select %p28, 0, %s27
    %s30 = ssub.s32 %s17, %s29
    %p31 = scmp.eq.s32.totalorder %s30, 0
    %s33 = sadd.s32 %s32, 1
    %s34 = scalar_select %p31, %s32, %s33
    %p37 = pneg %p31
    %p38 = scmp.eq.s32.totalorder %s10, 7
    %p39 = por %p37, %p38
    %p40 = scmp.ne.s32.totalorder %s32, %s35
    %p41 = scmp.eq.s32.totalorder %s10, 0
    %p42 = por %p40, %p41
    %p43 = scmp.ne.s32.totalorder %s32, %s35
    %p44 = scmp.eq.s32.totalorder %s15, 7
    %p45 = por %p43, %p44
    %p46 = scmp.ne.s32.totalorder %s35, %s36
    %p47 = scmp.eq.s32.totalorder %s15, 0
    %p48 = por %p46, %p47
    %p49 = scmp.ne.s32.totalorder %s35, %s36
    %p50 = scmp.eq.s32.totalorder %s16, 7
    %p51 = por %p49, %p50
    %p53 = scmp.ne.s32.totalorder %s36, %s52
    %p54 = scmp.eq.s32.totalorder %s16, 0
    %p55 = por %p53, %p54
    %s56 = ssub.s32 %s17, %s29
    %p57 = scmp.eq.s32.totalorder %s56, 0
    %s59 = sadd.s32 %s58, 1
    %s60 = scalar_select %p57, %s58, %s59
    %p63 = pneg %p57
    %p64 = scmp.eq.s32.totalorder %s10, 7
    %p65 = por %p63, %p64
    %p66 = scmp.ne.s32.totalorder %s58, %s61
    %p67 = scmp.eq.s32.totalorder %s10, 0
    %p68 = por %p66, %p67
    %p69 = scmp.ne.s32.totalorder %s58, %s61
    %p70 = scmp.eq.s32.totalorder %s15, 7
    %p71 = por %p69, %p70
    %p72 = scmp.ne.s32.totalorder %s61, %s62
    %p73 = scmp.eq.s32.totalorder %s15, 0
    %p74 = por %p72, %p73
    %p75 = scmp.ne.s32.totalorder %s61, %s62
    %p76 = scmp.eq.s32.totalorder %s16, 7
    %p77 = por %p75, %p76
    %p79 = scmp.ne.s32.totalorder %s62, %s78
    %p80 = scmp.eq.s32.totalorder %s16, 0
    %p81 = por %p79, %p80
    %s82 = ssub.s32 %s17, %s29
    %p83 = scmp.eq.s32.totalorder %s82, 0
    %s85 = sadd.s32 %s84, 1
    %s86 = scalar_select %p83, %s84, %s85
    %p89 = pneg %p83
    %p90 = scmp.eq.s32.totalorder %s10, 7
    %p91 = por %p89, %p90
    %p92 = scmp.ne.s32.totalorder %s84, %s87
    %p93 = scmp.eq.s32.totalorder %s10, 0
    %p94 = por %p92, %p93
    %p95 = scmp.ne.s32.totalorder %s84, %s87
    %p96 = scmp.eq.s32.totalorder %s15, 7
    %p97 = por %p95, %p96
    %p98 = scmp.ne.s32.totalorder %s87, %s88
    %p99 = scmp.eq.s32.totalorder %s15, 0
    %p100 = por %p98, %p99
    %p101 = scmp.ne.s32.totalorder %s87, %s88
    %p102 = scmp.eq.s32.totalorder %s16, 7
    %p103 = por %p101, %p102
    %p105 = scmp.ne.s32.totalorder %s88, %s104
    %p106 = scmp.eq.s32.totalorder %s16, 0
    %p107 = por %p105, %p106
    %s108 = ssub.s32 %s17, %s29
    %s109 = ssub.s32 %s18, %s25
    %s110 = sor.u32 %s108, %s109
    %p111 = scmp.eq.s32.totalorder %s110, 0
    %s113 = sadd.s32 %s112, 1
    %s114 = scalar_select %p111, %s112, %s113
    %p117 = pneg %p111
    %p118 = scmp.eq.s32.totalorder %s10, 7
    %p119 = por %p117, %p118
    %p120 = scmp.ne.s32.totalorder %s112, %s115
    %p121 = scmp.eq.s32.totalorder %s10, 0
    %p122 = por %p120, %p121
    %p123 = scmp.ne.s32.totalorder %s112, %s115
    %p124 = scmp.eq.s32.totalorder %s15, 7
    %p125 = por %p123, %p124
    %p126 = scmp.ne.s32.totalorder %s115, %s116
    %p127 = scmp.eq.s32.totalorder %s15, 0
    %p128 = por %p126, %p127
    %p129 = scmp.ne.s32.totalorder %s115, %s116
    %p130 = scmp.eq.s32.totalorder %s16, 7
    %p131 = por %p129, %p130
    %p133 = scmp.ne.s32.totalorder %s116, %s132
    %p134 = scmp.eq.s32.totalorder %s16, 0
    %p135 = por %p133, %p134
    %s136 = ssub.s32 %s17, %s29
    %s137 = ssub.s32 %s18, %s25
    %s138 = sor.u32 %s136, %s137
    %p139 = scmp.eq.s32.totalorder %s138, 0
    %s141 = sadd.s32 %s140, 1
    %s142 = scalar_select %p139, %s140, %s141
    %p145 = pneg %p139
    %p146 = scmp.eq.s32.totalorder %s10, 7
    %p147 = por %p145, %p146
    %p148 = scmp.ne.s32.totalorder %s140, %s143
    %p149 = scmp.eq.s32.totalorder %s10, 0
    %p150 = por %p148, %p149
    %p151 = scmp.ne.s32.totalorder %s140, %s143
    %p152 = scmp.eq.s32.totalorder %s15, 7
    %p153 = por %p151, %p152
    %p154 = scmp.ne.s32.totalorder %s143, %s144
    %p155 = scmp.eq.s32.totalorder %s15, 0
    %p156 = por %p154, %p155
    %p157 = scmp.ne.s32.totalorder %s143, %s144
    %p158 = scmp.eq.s32.totalorder %s16, 7
    %p159 = por %p157, %p158
    %p161 = scmp.ne.s32.totalorder %s144, %s160
    %p162 = scmp.eq.s32.totalorder %s16, 0
    %p163 = por %p161, %p162
    %p164 = scmp.le.s32.totalorder 1, %s10
    %p165 = scmp.lt.s32.totalorder %s10, 9
    %p166 = pnand %p164, %p165
    %p167 = pneg %p166
    // Predicated region
    $region9: #{s4d_forward.1} parent=5 // pred_check
      _
    $region10: #{s4d_forward.1} parent=5 // pred_check_branch
      %169 = sbr.rel (%p166) target = $region12
    $region11: #{s4d_forward.1} parent=5 // pred_region
      %s170 = ssub.s32 %s10, 1
    $region12: #{s4d_forward.1} parent=5 // pred_fallthru
      _
    %p171 = scmp.lt.s32.totalorder %s10, 8
    // Predicated region
    $region13: #{s4d_forward.1} parent=5 // pred_check
      %p172 = pneg %p171
    $region14: #{s4d_forward.1} parent=5 // pred_check_branch
      %174 = sbr.rel (%p172) target = $region16
    $region15: #{s4d_forward.1} parent=5 // pred_region
      // Predicated region
      $region17: #{s4d_forward.1} parent=15 // pred_check
        %p175 = pneg %p42
      $region18: #{s4d_forward.1} parent=15 // pred_check_branch
        %177 = sbr.rel (%p175) target = $region20
      $region19: #{s4d_forward.1} parent=15 // pred_region
        %p178 = scmp.lt.s32.totalorder %s17, 7
        %s179 = scalar_select %p178, %s17, 7
        %s180 = smul.addr %s179, 8
        %s181 = scalar_lea.vmem %s0, %s180
      $region20: #{s4d_forward.1} parent=15 // pred_fallthru
        _
      // Predicated region
      $region21: #{s4d_forward.1} parent=15 // pred_check
        %p182 = pneg %p68
      $region22: #{s4d_forward.1} parent=15 // pred_check_branch
        %184 = sbr.rel (%p182) target = $region24
      $region23: #{s4d_forward.1} parent=15 // pred_region
        %p185 = scmp.lt.s32.totalorder %s17, 7
        %s186 = scalar_select %p185, %s17, 7
        %s187 = smul.addr %s186, 4
        %s188 = scalar_lea.vmem %s1, %s187
      $region24: #{s4d_forward.1} parent=15 // pred_fallthru
        _
      // Predicated region
      $region25: #{s4d_forward.1} parent=15 // pred_check
        %p189 = pneg %p94
      $region26: #{s4d_forward.1} parent=15 // pred_check_branch
        %191 = sbr.rel (%p189) target = $region28
      $region27: #{s4d_forward.1} parent=15 // pred_region
        %p192 = scmp.lt.s32.totalorder %s17, 7
        %s193 = scalar_select %p192, %s17, 7
        %s194 = smul.addr %s193, 8
        %s195 = scalar_lea.vmem %s2, %s194
      $region28: #{s4d_forward.1} parent=15 // pred_fallthru
        _
      // Predicated region
      $region29: #{s4d_forward.1} parent=15 // pred_check
        %p196 = pneg %p122
      $region30: #{s4d_forward.1} parent=15 // pred_check_branch
        %198 = sbr.rel (%p196) target = $region32
      $region31: #{s4d_forward.1} parent=15 // pred_region
        %p199 = scmp.lt.s32.totalorder %s17, 7
        %s200 = scalar_select %p199, %s17, 7
        %p201 = scmp.lt.s32.totalorder %s18, 0
        %s202 = scalar_select %p201, %s18, 0
        %s203 = sadd.s32 %s202, %s200
        %s204 = scalar_lea.vmem %s3, %s203
      $region32: #{s4d_forward.1} parent=15 // pred_fallthru
        _
    $region16: #{s4d_forward.1} parent=5 // pred_fallthru
      _
    %p205 = scmp.le.s32.totalorder 1, %s10
    %p206 = scmp.lt.s32.totalorder %s10, 9
    %p207 = pnand %p205, %p206
    %p208 = pneg %p207
    // Predicated region
    $region33: #{s4d_forward.1} parent=5 // pred_check
      _
    $region34: #{s4d_forward.1} parent=5 // pred_check_branch
      %210 = sbr.rel (%p207) target = $region36
    $region35: #{s4d_forward.1} parent=5 // pred_region
      %s211 = ssub.s32 %s10, 1
      %p212 = scmp.lt.s32.totalorder %s19, 7
      %s213 = scalar_select %p212, %s19, 7
      %s214 = smul.addr %s213, 8
      %s215 = scalar_lea.vmem %s0, %s214
      %p216 = pneg %p48
      %p217 = pneg %p45
      %p218 = scmp.lt.s32.totalorder %s19, 7
      %s219 = scalar_select %p218, %s19, 7
      %s220 = smul.addr %s219, 4
      %s221 = scalar_lea.vmem %s1, %s220
      %p222 = pneg %p74
      %p223 = pneg %p71
      %p224 = scmp.lt.s32.totalorder %s19, 7
      %s225 = scalar_select %p224, %s19, 7
      %s226 = smul.addr %s225, 8
      %s227 = scalar_lea.vmem %s2, %s226
      %p228 = pneg %p100
      %p229 = pneg %p97
      %p230 = scmp.lt.s32.totalorder %s19, 7
      %s231 = scalar_select %p230, %s19, 7
      %p232 = scmp.lt.s32.totalorder %s20, 0
      %s233 = scalar_select %p232, %s20, 0
      %s234 = sadd.s32 %s233, %s231
      %s235 = scalar_lea.vmem %s3, %s234
      %p236 = pneg %p128
      %p237 = pneg %p125
      %p238 = pneg %p156
      %p239 = pneg %p153
      %p240 = scmp.lt.s32.totalorder %s19, 7
      %s241 = scalar_select %p240, %s19, 7
      %p242 = scmp.lt.s32.totalorder %s20, 0
      %s243 = scalar_select %p242, %s20, 0
      %s244 = sadd.s32 %s243, %s241
      %s245 = smul.addr %s244, 2
      %s246 = scalar_lea.vmem %s4, %s245
      %p247 = scmp.lt.s32.totalorder %s19, 7
      %s248 = scalar_select %p247, %s19, 7
      %s249 = smul.addr %s248, 8
      %s250 = scalar_lea.vmem %s0, %s249
      %p251 = scmp.lt.s32.totalorder %s19, 7
      %s252 = scalar_select %p251, %s19, 7
      %s253 = smul.addr %s252, 4
      %s254 = scalar_lea.vmem %s1, %s253
      %p255 = scmp.lt.s32.totalorder %s19, 7
      %s256 = scalar_select %p255, %s19, 7
      %s257 = smul.addr %s256, 8
      %s258 = scalar_lea.vmem %s2, %s257
      %p259 = scmp.lt.s32.totalorder %s19, 7
      %s260 = scalar_select %p259, %s19, 7
      %p261 = scmp.lt.s32.totalorder %s20, 0
      %s262 = scalar_select %p261, %s20, 0
      %s263 = sadd.s32 %s262, %s260
      %s264 = scalar_lea.vmem %s3, %s263
      %p265 = scmp.lt.s32.totalorder %s19, 7
      %s266 = scalar_select %p265, %s19, 7
      %p267 = scmp.lt.s32.totalorder %s20, 0
      %s268 = scalar_select %p267, %s20, 0
      %s269 = sadd.s32 %s268, %s266
      %s270 = smul.addr %s269, 2
      %s271 = scalar_lea.vmem %s4, %s270
      %p273 = scmp.eq.s32.totalorder %s20, 0
      // Predicated region
      $region37: #{s4d_forward.1} parent=35 // pred_check
        %p274 = pneg %p273
      $region38: #{s4d_forward.1} parent=35 // pred_check_branch
        %276 = sbr.rel (%p274) target = $region40
      $region39: #{s4d_forward.1} parent=35 // pred_region
        %v277 = vld [vmem:[%s250] sm:$0xff]
        %v278 = vld [vmem:[%s254] sm:$0xf]
        %v279 = vlaneseq
        %v280 = vand.u32 %v279, 127
        %v281 = vcvt.s32.f32 %v280
        %v282 = vlaneseq
        %v283 = vshrl.u32 %v282, 7
        %v284 = vadd.s32 %v283, 8
        %v285 = vcvt.s32.f32 %v283
        %v286 = vcvt.s32.f32 %v284
        %288 = vset.pattern.permute.xlu0 0
        %289 = vperm.xlu0 %288, %v277
        %v290 = vpop.permute.xlu0 %289
        %v292 = vmul.f32 %v290, %v281
        %v293 = vmul.f32 %v292, 1.442695
        %v294 = vpow.pop %v293
        %295 = vset.pattern.permute.xlu0 1
        %296 = vperm.xlu0 %295, %v277
        %v297 = vpop.permute.xlu0 %296
        %v299 = vmul.f32 %v297, %v281
        %v300 = vand.u32 2147483647, %v299
        %vm301 = vcmp.le.f32.partialorder %v300, 0.7853982
        %vm302 = vcmp.lt.s32.totalorder %v299, 0
        %v303 = vand.u32 %v299, 2139095040
        %v304 = vshrl.u32 %v303, 23
        %v305 = vsub.s32 %v304, 127
        %v306 = vand.u32 2147483647, %v299
        %v307 = vand.u32 %v306, 8388607
        %v308 = vor.u32 %v307, 8388608
        %v309 = vsub.s32 0, %v308
        %v310 = vadd.s32 %v305, 1
        %vm311 = vcmp.gt.s32.totalorder %v310, 0
        %v312 = vsel %vm311, %v310, 0
        %v313 = vshrl.u32 %v312, 5
        %v314 = vand.u32 %v312, 31
        %v315 = vsub.s32 32, %v314
        %v316 = vshrl.u32 683565275, %v315
        %v317 = vshll.u32 683565275, %v314
        %v318 = vshrl.u32 2475754826, %v315
        %v319 = vor.u32 %v317, %v318
        %v320 = vshll.u32 2475754826, %v314
        %v321 = vshrl.u32 2131351028, %v315
        %v322 = vor.u32 %v320, %v321
        %v323 = vshll.u32 2131351028, %v314
        %v324 = vshrl.u32 2102212464, %v315
        %v325 = vor.u32 %v323, %v324
        %v326 = vshll.u32 2102212464, %v314
        %v327 = vshrl.u32 920167782, %v315
        %v328 = vor.u32 %v326, %v327
        %v329 = vshll.u32 920167782, %v314
        %v330 = vshrl.u32 1326507024, %v315
        %v331 = vor.u32 %v329, %v330
        %vm332 = vcmp.lt.s32.totalorder %v313, 1
        %vm333 = vcmp.lt.s32.totalorder %v313, 2
        %vm334 = vcmp.lt.s32.totalorder %v313, 3
        %vm335 = vcmp.lt.s32.totalorder %v313, 4
        %v336 = vsel %vm332, %v316, %v319
        %v337 = vsel %vm335, %v325, 2102212464
        %v338 = vsel %vm334, %v322, %v337
        %v339 = vsel %vm333, %v336, %v338
        %v340 = vsel %vm332, %v319, %v322
        %v341 = vsel %vm335, %v328, 920167782
        %v342 = vsel %vm334, %v325, %v341
        %v343 = vsel %vm333, %v340, %v342
        %v344 = vsel %vm332, %v322, %v325
        %v345 = vsel %vm335, %v331, 1326507024
        %v346 = vsel %vm334, %v328, %v345
        %v347 = vsel %vm333, %v344, %v346
        %v348 = vshll.u32 %v308, 8
        %v349 = vand.u32 %v348, 65535
        %v350 = vshrl.u32 %v348, 16
        %v351 = vand.u32 %v347, 65535
        %v352 = vshrl.u32 %v347, 16
        %v353 = vmul.u32 %v349, %v351
        %v354 = vmul.u32 %v349, %v352
        %v355 = vmul.u32 %v350, %v351
        %v356 = vmul.u32 %v350, %v352
        %v357 = vshll.u32 %v354, 16
        %v358 = vshrl.u32 %v354, 16
        %v359 = vshll.u32 %v355, 16
        %v360 = vshrl.u32 %v355, 16
        %vm361 = vc.u32 %v353, %v357
        %v362 = vsel %vm361, 1, 0
        %v363 = vadd.s32 %v353, %v357
        %v364 = vadd.s32 %v356, %v362
        %vm365 = vc.u32 %v363, %v359
        %v366 = vsel %vm365, 1, 0
        %v367 = vadd.s32 %v363, %v359
        %v368 = vadd.s32 %v364, %v366
        %v369 = vadd.s32 %v368, %v358
        %v370 = vadd.s32 %v369, %v360
        %v371 = vand.u32 %v348, 65535
        %v372 = vshrl.u32 %v348, 16
        %v373 = vand.u32 %v343, 65535
        %v374 = vshrl.u32 %v343, 16
        %v375 = vmul.u32 %v371, %v373
        %v376 = vmul.u32 %v371, %v374
        %v377 = vmul.u32 %v372, %v373
        %v378 = vmul.u32 %v372, %v374
        %v379 = vshll.u32 %v376, 16
        %v380 = vshrl.u32 %v376, 16
        %v381 = vshll.u32 %v377, 16
        %v382 = vshrl.u32 %v377, 16
        %vm383 = vc.u32 %v375, %v379
        %v384 = vsel %vm383, 1, 0
        %v385 = vadd.s32 %v375, %v379
        %v386 = vadd.s32 %v378, %v384
        %vm387 = vc.u32 %v385, %v381
        %v388 = vsel %vm387, 1, 0
        %v389 = vadd.s32 %v385, %v381
        %v390 = vadd.s32 %v386, %v388
        %v391 = vadd.s32 %v390, %v380
        %v392 = vadd.s32 %v391, %v382
        %v393 = vmul.u32 %v348, %v339
        %v394 = vadd.s32 %v370, %v389
        %vm395 = vc.u32 %v370, %v389
        %v396 = vadd.s32 %v392, 1
        %v397 = vsel %vm395, %v396, %v392
        %v398 = vadd.s32 %v393, %v397
        %v399 = vadd.s32 %v398, 536870912
        %v400 = vshrl.u32 %v399, 30
        %v401 = vshll.u32 %v400, 30
        %v402 = vsub.s32 %v398, %v401
        %vm403 = vcmp.lt.s32.totalorder %v402, 0
        %v404 = vsub.s32 0, %v402
        %v405 = vsel %vm403, %v404, %v402
        %v406 = vclz %v405
        %v407 = vsub.s32 %v406, 2
        %vm408 = vcmp.gt.s32.totalorder 0, %v407
        %v409 = vsel %vm408, 0, %v407
        %v410 = vsub.s32 32, %v409
        %v411 = vshll.u32 %v402, %v409
        %v412 = vshrl.u32 %v394, %v410
        %v413 = vor.u32 %v411, %v412
        %v414 = vsub.s32 4294967266, %v409
        %v415 = vadd.s32 %v414, 127
        %v416 = vshll.u32 %v415, 23
        %v417 = vor.u32 4788187, %v416
        %v418 = vand.u32 2147483647, %v417
        %v420 = vcvt.s32.f32 %v413
        %v421 = vmul.f32 %v420, %v418
        %v422 = vxor.u32 %v421, 2147483648
        %v423 = vsel %vm302, %v422, %v421
        %v424 = vsub.s32 4, %v400
        %v425 = vsel %vm302, %v424, %v400
        %v426 = vsel %vm301, %v299, %v423
        %v427 = vsel %vm301, 0, %v425
        %v428 = vmul.f32 %v426, %v426
        %v429 = vmul.f32 %v428, -0.001358992
        %v430 = vadd.f32 %v429, 0.041655596
        %v431 = vmul.f32 %v428, %v430
        %v432 = vadd.f32 %v431, -0.4999988
        %v433 = vmul.f32 %v428, %v432
        %v434 = vadd.f32 1.0, %v433
        %v435 = vmul.f32 %v426, %v426
        %v436 = vmul.f32 %v435, -0.00019511016
        %v437 = vadd.f32 %v436, 0.008332121
        %v438 = vmul.f32 %v435, %v437
        %v439 = vadd.f32 %v438, -0.16666654
        %v440 = vmul.f32 %v435, %v439
        %v441 = vadd.f32 %v440, 1.0
        %v442 = vmul.f32 %v441, %v426
        %vm443 = vweird.f32 %v299
        %v444 = vand.u32 %v427, 3
        %vm445 = vcmp.lt.s32.totalorder %v444, 2
        %vm446 = vcmp.eq.s32.totalorder %v444, 0
        %v447 = vxor.u32 %v442, 2147483648
        %v448 = vsel %vm446, %v434, %v447
        %vm449 = vcmp.eq.s32.totalorder %v444, 2
        %v450 = vxor.u32 %v434, 2147483648
        %v451 = vsel %vm449, %v450, %v442
        %v452 = vsel %vm445, %v448, %v451
        %v453 = vsel %vm443, nan, %v452
        %454 = vset.pattern.permute.xlu0 2
        %455 = vperm.xlu0 %454, %v277
        %v456 = vpop.permute.xlu0 %455
        %v458 = vmul.f32 %v456, %v453
        %v459 = vand.u32 2147483647, %v299
        %vm460 = vcmp.le.f32.partialorder %v459, 0.7853982
        %vm461 = vcmp.lt.s32.totalorder %v299, 0
        %v462 = vand.u32 %v299, 2139095040
        %v463 = vshrl.u32 %v462, 23
        %v464 = vsub.s32 %v463, 127
        %v465 = vand.u32 2147483647, %v299
        %v466 = vand.u32 %v465, 8388607
        %v467 = vor.u32 %v466, 8388608
        %v468 = vsub.s32 0, %v467
        %v469 = vadd.s32 %v464, 1
        %vm470 = vcmp.gt.s32.totalorder %v469, 0
        %v471 = vsel %vm470, %v469, 0
        %v472 = vshrl.u32 %v471, 5
        %v473 = vand.u32 %v471, 31
        %v474 = vsub.s32 32, %v473
        %v475 = vshrl.u32 683565275, %v474
        %v476 = vshll.u32 683565275, %v473
        %v477 = vshrl.u32 2475754826, %v474
        %v478 = vor.u32 %v476, %v477
        %v479 = vshll.u32 2475754826, %v473
        %v480 = vshrl.u32 2131351028, %v474
        %v481 = vor.u32 %v479, %v480
        %v482 = vshll.u32 2131351028, %v473
        %v483 = vshrl.u32 2102212464, %v474
        %v484 = vor.u32 %v482, %v483
        %v485 = vshll.u32 2102212464, %v473
        %v486 = vshrl.u32 920167782, %v474
        %v487 = vor.u32 %v485, %v486
        %v488 = vshll.u32 920167782, %v473
        %v489 = vshrl.u32 1326507024, %v474
        %v490 = vor.u32 %v488, %v489
        %vm491 = vcmp.lt.s32.totalorder %v472, 1
        %vm492 = vcmp.lt.s32.totalorder %v472, 2
        %vm493 = vcmp.lt.s32.totalorder %v472, 3
        %vm494 = vcmp.lt.s32.totalorder %v472, 4
        %v495 = vsel %vm491, %v475, %v478
        %v496 = vsel %vm494, %v484, 2102212464
        %v497 = vsel %vm493, %v481, %v496
        %v498 = vsel %vm492, %v495, %v497
        %v499 = vsel %vm491, %v478, %v481
        %v500 = vsel %vm494, %v487, 920167782
        %v501 = vsel %vm493, %v484, %v500
        %v502 = vsel %vm492, %v499, %v501
        %v503 = vsel %vm491, %v481, %v484
        %v504 = vsel %vm494, %v490, 1326507024
        %v505 = vsel %vm493, %v487, %v504
        %v506 = vsel %vm492, %v503, %v505
        %v507 = vshll.u32 %v467, 8
        %v508 = vand.u32 %v507, 65535
        %v509 = vshrl.u32 %v507, 16
        %v510 = vand.u32 %v506, 65535
        %v511 = vshrl.u32 %v506, 16
        %v512 = vmul.u32 %v508, %v510
        %v513 = vmul.u32 %v508, %v511
        %v514 = vmul.u32 %v509, %v510
        %v515 = vmul.u32 %v509, %v511
        %v516 = vshll.u32 %v513, 16
        %v517 = vshrl.u32 %v513, 16
        %v518 = vshll.u32 %v514, 16
        %v519 = vshrl.u32 %v514, 16
        %vm520 = vc.u32 %v512, %v516
        %v521 = vsel %vm520, 1, 0
        %v522 = vadd.s32 %v512, %v516
        %v523 = vadd.s32 %v515, %v521
        %vm524 = vc.u32 %v522, %v518
        %v525 = vsel %vm524, 1, 0
        %v526 = vadd.s32 %v522, %v518
        %v527 = vadd.s32 %v523, %v525
        %v528 = vadd.s32 %v527, %v517
        %v529 = vadd.s32 %v528, %v519
        %v530 = vand.u32 %v507, 65535
        %v531 = vshrl.u32 %v507, 16
        %v532 = vand.u32 %v502, 65535
        %v533 = vshrl.u32 %v502, 16
        %v534 = vmul.u32 %v530, %v532
        %v535 = vmul.u32 %v530, %v533
        %v536 = vmul.u32 %v531, %v532
        %v537 = vmul.u32 %v531, %v533
        %v538 = vshll.u32 %v535, 16
        %v539 = vshrl.u32 %v535, 16
        %v540 = vshll.u32 %v536, 16
        %v541 = vshrl.u32 %v536, 16
        %vm542 = vc.u32 %v534, %v538
        %v543 = vsel %vm542, 1, 0
        %v544 = vadd.s32 %v534, %v538
        %v545 = vadd.s32 %v537, %v543
        %vm546 = vc.u32 %v544, %v540
        %v547 = vsel %vm546, 1, 0
        %v548 = vadd.s32 %v544, %v540
        %v549 = vadd.s32 %v545, %v547
        %v550 = vadd.s32 %v549, %v539
        %v551 = vadd.s32 %v550, %v541
        %v552 = vmul.u32 %v507, %v498
        %v553 = vadd.s32 %v529, %v548
        %vm554 = vc.u32 %v529, %v548
        %v555 = vadd.s32 %v551, 1
        %v556 = vsel %vm554, %v555, %v551
        %v557 = vadd.s32 %v552, %v556
        %v558 = vadd.s32 %v557, 536870912
        %v559 = vshrl.u32 %v558, 30
        %v560 = vshll.u32 %v559, 30
        %v561 = vsub.s32 %v557, %v560
        %vm562 = vcmp.lt.s32.totalorder %v561, 0
        %v563 = vsub.s32 0, %v561
        %v564 = vsel %vm562, %v563, %v561
        %v565 = vclz %v564
        %v566 = vsub.s32 %v565, 2
        %vm567 = vcmp.gt.s32.totalorder 0, %v566
        %v568 = vsel %vm567, 0, %v566
        %v569 = vsub.s32 32, %v568
        %v570 = vshll.u32 %v561, %v568
        %v571 = vshrl.u32 %v553, %v569
        %v572 = vor.u32 %v570, %v571
        %v573 = vsub.s32 4294967266, %v568
        %v574 = vadd.s32 %v573, 127
        %v575 = vshll.u32 %v574, 23
        %v576 = vor.u32 4788187, %v575
        %v577 = vand.u32 2147483647, %v576
        %v579 = vcvt.s32.f32 %v572
        %v580 = vmul.f32 %v579, %v577
        %v581 = vxor.u32 %v580, 2147483648
        %v582 = vsel %vm461, %v581, %v580
        %v583 = vsub.s32 4, %v559
        %v584 = vsel %vm461, %v583, %v559
        %v585 = vsel %vm460, %v299, %v582
        %v586 = vsel %vm460, 0, %v584
        %v587 = vmul.f32 %v585, %v585
        %v588 = vmul.f32 %v587, -0.001358992
        %v589 = vadd.f32 %v588, 0.041655596
        %v590 = vmul.f32 %v587, %v589
        %v591 = vadd.f32 %v590, -0.4999988
        %v592 = vmul.f32 %v587, %v591
        %v593 = vadd.f32 1.0, %v592
        %v594 = vmul.f32 %v585, %v585
        %v595 = vmul.f32 %v594, -0.00019511016
        %v596 = vadd.f32 %v595, 0.008332121
        %v597 = vmul.f32 %v594, %v596
        %v598 = vadd.f32 %v597, -0.16666654
        %v599 = vmul.f32 %v594, %v598
        %v600 = vadd.f32 %v599, 1.0
        %v601 = vmul.f32 %v600, %v585
        %vm602 = vweird.f32 %v299
        %v603 = vadd.s32 %v586, 3
        %v604 = vand.u32 %v603, 3
        %vm605 = vcmp.lt.s32.totalorder %v604, 2
        %vm606 = vcmp.eq.s32.totalorder %v604, 0
        %v607 = vxor.u32 %v601, 2147483648
        %v608 = vsel %vm606, %v593, %v607
        %vm609 = vcmp.eq.s32.totalorder %v604, 2
        %v610 = vxor.u32 %v593, 2147483648
        %v611 = vsel %vm609, %v610, %v601
        %v612 = vsel %vm605, %v608, %v611
        %v613 = vsel %vm602, nan, %v612
        %614 = vset.pattern.permute.xlu0 3
        %615 = vperm.xlu0 %614, %v277
        %v616 = vpop.permute.xlu0 %615
        %v618 = vmul.f32 %v616, %v613
        %v619 = vadd.f32 %v458, %v618
        %v620 = vmul.f32 %v294, %v619
        %vm621 = vcmask 130048
        %622 = vst.msk [vmem:[#allocation3] sm:$0xff] %vm621, %v620
        %v623 = vsub.f32 16.0, %v285
        %v624 = vsub.f32 16.0, %v286
        %v625 = vperm.slane %v278, 0
        %v626 = vmul.f32 %v623, %v625
        %v627 = vmul.f32 %v624, %v625
        %v628 = vmul.f32 %v626, 1.442695
        %v629 = vpow.pop %v628
        %v630 = vmul.f32 %v627, 1.442695
        %v631 = vpow.pop %v630
        %v632 = vperm.slane %v278, 1
        %v633 = vmul.f32 %v623, %v632
        %v634 = vmul.f32 %v624, %v632
        %v635 = vand.u32 2147483647, %v633
        %vm636 = vcmp.le.f32.partialorder %v635, 0.7853982
        %vm637 = vcmp.lt.s32.totalorder %v633, 0
        %v638 = vand.u32 %v633, 2139095040
        %v639 = vshrl.u32 %v638, 23
        %v640 = vsub.s32 %v639, 127
        %v641 = vand.u32 2147483647, %v633
        %v642 = vand.u32 %v641, 8388607
        %v643 = vor.u32 %v642, 8388608
        %v644 = vsub.s32 0, %v643
        %v645 = vadd.s32 %v640, 1
        %vm646 = vcmp.gt.s32.totalorder %v645, 0
        %v647 = vsel %vm646, %v645, 0
        %v648 = vshrl.u32 %v647, 5
        %v649 = vand.u32 %v647, 31
        %v650 = vsub.s32 32, %v649
        %v651 = vshrl.u32 683565275, %v650
        %v652 = vshll.u32 683565275, %v649
        %v653 = vshrl.u32 2475754826, %v650
        %v654 = vor.u32 %v652, %v653
        %v655 = vshll.u32 2475754826, %v649
        %v656 = vshrl.u32 2131351028, %v650
        %v657 = vor.u32 %v655, %v656
        %v658 = vshll.u32 2131351028, %v649
        %v659 = vshrl.u32 2102212464, %v650
        %v660 = vor.u32 %v658, %v659
        %v661 = vshll.u32 2102212464, %v649
        %v662 = vshrl.u32 920167782, %v650
        %v663 = vor.u32 %v661, %v662
        %v664 = vshll.u32 920167782, %v649
        %v665 = vshrl.u32 1326507024, %v650
        %v666 = vor.u32 %v664, %v665
        %vm667 = vcmp.lt.s32.totalorder %v648, 1
        %vm668 = vcmp.lt.s32.totalorder %v648, 2
        %vm669 = vcmp.lt.s32.totalorder %v648, 3
        %vm670 = vcmp.lt.s32.totalorder %v648, 4
        %v671 = vsel %vm667, %v651, %v654
        %v672 = vsel %vm670, %v660, 2102212464
        %v673 = vsel %vm669, %v657, %v672
        %v674 = vsel %vm668, %v671, %v673
        %v675 = vsel %vm667, %v654, %v657
        %v676 = vsel %vm670, %v663, 920167782
        %v677 = vsel %vm669, %v660, %v676
        %v678 = vsel %vm668, %v675, %v677
        %v679 = vsel %vm667, %v657, %v660
        %v680 = vsel %vm670, %v666, 1326507024
        %v681 = vsel %vm669, %v663, %v680
        %v682 = vsel %vm668, %v679, %v681
        %v683 = vshll.u32 %v643, 8
        %v684 = vand.u32 %v683, 65535
        %v685 = vshrl.u32 %v683, 16
        %v686 = vand.u32 %v682, 65535
        %v687 = vshrl.u32 %v682, 16
        %v688 = vmul.u32 %v684, %v686
        %v689 = vmul.u32 %v684, %v687
        %v690 = vmul.u32 %v685, %v686
        %v691 = vmul.u32 %v685, %v687
        %v692 = vshll.u32 %v689, 16
        %v693 = vshrl.u32 %v689, 16
        %v694 = vshll.u32 %v690, 16
        %v695 = vshrl.u32 %v690, 16
        %vm696 = vc.u32 %v688, %v692
        %v697 = vsel %vm696, 1, 0
        %v698 = vadd.s32 %v688, %v692
        %v699 = vadd.s32 %v691, %v697
        %vm700 = vc.u32 %v698, %v694
        %v701 = vsel %vm700, 1, 0
        %v702 = vadd.s32 %v698, %v694
        %v703 = vadd.s32 %v699, %v701
        %v704 = vadd.s32 %v703, %v693
        %v705 = vadd.s32 %v704, %v695
        %v706 = vand.u32 %v683, 65535
        %v707 = vshrl.u32 %v683, 16
        %v708 = vand.u32 %v678, 65535
        %v709 = vshrl.u32 %v678, 16
        %v710 = vmul.u32 %v706, %v708
        %v711 = vmul.u32 %v706, %v709
        %v712 = vmul.u32 %v707, %v708
        %v713 = vmul.u32 %v707, %v709
        %v714 = vshll.u32 %v711, 16
        %v715 = vshrl.u32 %v711, 16
        %v716 = vshll.u32 %v712, 16
        %v717 = vshrl.u32 %v712, 16
        %vm718 = vc.u32 %v710, %v714
        %v719 = vsel %vm718, 1, 0
        %v720 = vadd.s32 %v710, %v714
        %v721 = vadd.s32 %v713, %v719
        %vm722 = vc.u32 %v720, %v716
        %v723 = vsel %vm722, 1, 0
        %v724 = vadd.s32 %v720, %v716
        %v725 = vadd.s32 %v721, %v723
        %v726 = vadd.s32 %v725, %v715
        %v727 = vadd.s32 %v726, %v717
        %v728 = vmul.u32 %v683, %v674
        %v729 = vadd.s32 %v705, %v724
        %vm730 = vc.u32 %v705, %v724
        %v731 = vadd.s32 %v727, 1
        %v732 = vsel %vm730, %v731, %v727
        %v733 = vadd.s32 %v728, %v732
        %v734 = vadd.s32 %v733, 536870912
        %v735 = vshrl.u32 %v734, 30
        %v736 = vshll.u32 %v735, 30
        %v737 = vsub.s32 %v733, %v736
        %vm738 = vcmp.lt.s32.totalorder %v737, 0
        %v739 = vsub.s32 0, %v737
        %v740 = vsel %vm738, %v739, %v737
        %v741 = vclz %v740
        %v742 = vsub.s32 %v741, 2
        %vm743 = vcmp.gt.s32.totalorder 0, %v742
        %v744 = vsel %vm743, 0, %v742
        %v745 = vsub.s32 32, %v744
        %v746 = vshll.u32 %v737, %v744
        %v747 = vshrl.u32 %v729, %v745
        %v748 = vor.u32 %v746, %v747
        %v749 = vsub.s32 4294967266, %v744
        %v750 = vadd.s32 %v749, 127
        %v751 = vshll.u32 %v750, 23
        %v752 = vor.u32 4788187, %v751
        %v753 = vand.u32 2147483647, %v752
        %v755 = vcvt.s32.f32 %v748
        %v756 = vmul.f32 %v755, %v753
        %v757 = vxor.u32 %v756, 2147483648
        %v758 = vsel %vm637, %v757, %v756
        %v759 = vsub.s32 4, %v735
        %v760 = vsel %vm637, %v759, %v735
        %v761 = vsel %vm636, %v633, %v758
        %v762 = vsel %vm636, 0, %v760
        %v763 = vmul.f32 %v761, %v761
        %v764 = vmul.f32 %v763, -0.001358992
        %v765 = vadd.f32 %v764, 0.041655596
        %v766 = vmul.f32 %v763, %v765
        %v767 = vadd.f32 %v766, -0.4999988
        %v768 = vmul.f32 %v763, %v767
        %v769 = vadd.f32 1.0, %v768
        %v770 = vmul.f32 %v761, %v761
        %v771 = vmul.f32 %v770, -0.00019511016
        %v772 = vadd.f32 %v771, 0.008332121
        %v773 = vmul.f32 %v770, %v772
        %v774 = vadd.f32 %v773, -0.16666654
        %v775 = vmul.f32 %v770, %v774
        %v776 = vadd.f32 %v775, 1.0
        %v777 = vmul.f32 %v776, %v761
        %vm778 = vweird.f32 %v633
        %v779 = vand.u32 %v762, 3
        %vm780 = vcmp.lt.s32.totalorder %v779, 2
        %vm781 = vcmp.eq.s32.totalorder %v779, 0
        %v782 = vxor.u32 %v777, 2147483648
        %v783 = vsel %vm781, %v769, %v782
        %vm784 = vcmp.eq.s32.totalorder %v779, 2
        %v785 = vxor.u32 %v769, 2147483648
        %v786 = vsel %vm784, %v785, %v777
        %v787 = vsel %vm780, %v783, %v786
        %v788 = vsel %vm778, nan, %v787
        %v789 = vand.u32 2147483647, %v634
        %vm790 = vcmp.le.f32.partialorder %v789, 0.7853982
        %vm791 = vcmp.lt.s32.totalorder %v634, 0
        %v792 = vand.u32 %v634, 2139095040
        %v793 = vshrl.u32 %v792, 23
        %v794 = vsub.s32 %v793, 127
        %v795 = vand.u32 2147483647, %v634
        %v796 = vand.u32 %v795, 8388607
        %v797 = vor.u32 %v796, 8388608
        %v798 = vsub.s32 0, %v797
        %v799 = vadd.s32 %v794, 1
        %vm800 = vcmp.gt.s32.totalorder %v799, 0
        %v801 = vsel %vm800, %v799, 0
        %v802 = vshrl.u32 %v801, 5
        %v803 = vand.u32 %v801, 31
        %v804 = vsub.s32 32, %v803
        %v805 = vshrl.u32 683565275, %v804
        %v806 = vshll.u32 683565275, %v803
        %v807 = vshrl.u32 2475754826, %v804
        %v808 = vor.u32 %v806, %v807
        %v809 = vshll.u32 2475754826, %v803
        %v810 = vshrl.u32 2131351028, %v804
        %v811 = vor.u32 %v809, %v810
        %v812 = vshll.u32 2131351028, %v803
        %v813 = vshrl.u32 2102212464, %v804
        %v814 = vor.u32 %v812, %v813
        %v815 = vshll.u32 2102212464, %v803
        %v816 = vshrl.u32 920167782, %v804
        %v817 = vor.u32 %v815, %v816
        %v818 = vshll.u32 920167782, %v803
        %v819 = vshrl.u32 1326507024, %v804
        %v820 = vor.u32 %v818, %v819
        %vm821 = vcmp.lt.s32.totalorder %v802, 1
        %vm822 = vcmp.lt.s32.totalorder %v802, 2
        %vm823 = vcmp.lt.s32.totalorder %v802, 3
        %vm824 = vcmp.lt.s32.totalorder %v802, 4
        %v825 = vsel %vm821, %v805, %v808
        %v826 = vsel %vm824, %v814, 2102212464
        %v827 = vsel %vm823, %v811, %v826
        %v828 = vsel %vm822, %v825, %v827
        %v829 = vsel %vm821, %v808, %v811
        %v830 = vsel %vm824, %v817, 920167782
        %v831 = vsel %vm823, %v814, %v830
        %v832 = vsel %vm822, %v829, %v831
        %v833 = vsel %vm821, %v811, %v814
        %v834 = vsel %vm824, %v820, 1326507024
        %v835 = vsel %vm823, %v817, %v834
        %v836 = vsel %vm822, %v833, %v835
        %v837 = vshll.u32 %v797, 8
        %v838 = vand.u32 %v837, 65535
        %v839 = vshrl.u32 %v837, 16
        %v840 = vand.u32 %v836, 65535
        %v841 = vshrl.u32 %v836, 16
        %v842 = vmul.u32 %v838, %v840
        %v843 = vmul.u32 %v838, %v841
        %v844 = vmul.u32 %v839, %v840
        %v845 = vmul.u32 %v839, %v841
        %v846 = vshll.u32 %v843, 16
        %v847 = vshrl.u32 %v843, 16
        %v848 = vshll.u32 %v844, 16
        %v849 = vshrl.u32 %v844, 16
        %vm850 = vc.u32 %v842, %v846
        %v851 = vsel %vm850, 1, 0
        %v852 = vadd.s32 %v842, %v846
        %v853 = vadd.s32 %v845, %v851
        %vm854 = vc.u32 %v852, %v848
        %v855 = vsel %vm854, 1, 0
        %v856 = vadd.s32 %v852, %v848
        %v857 = vadd.s32 %v853, %v855
        %v858 = vadd.s32 %v857, %v847
        %v859 = vadd.s32 %v858, %v849
        %v860 = vand.u32 %v837, 65535
        %v861 = vshrl.u32 %v837, 16
        %v862 = vand.u32 %v832, 65535
        %v863 = vshrl.u32 %v832, 16
        %v864 = vmul.u32 %v860, %v862
        %v865 = vmul.u32 %v860, %v863
        %v866 = vmul.u32 %v861, %v862
        %v867 = vmul.u32 %v861, %v863
        %v868 = vshll.u32 %v865, 16
        %v869 = vshrl.u32 %v865, 16
        %v870 = vshll.u32 %v866, 16
        %v871 = vshrl.u32 %v866, 16
        %vm872 = vc.u32 %v864, %v868
        %v873 = vsel %vm872, 1, 0
        %v874 = vadd.s32 %v864, %v868
        %v875 = vadd.s32 %v867, %v873
        %vm876 = vc.u32 %v874, %v870
        %v877 = vsel %vm876, 1, 0
        %v878 = vadd.s32 %v874, %v870
        %v879 = vadd.s32 %v875, %v877
        %v880 = vadd.s32 %v879, %v869
        %v881 = vadd.s32 %v880, %v871
        %v882 = vmul.u32 %v837, %v828
        %v883 = vadd.s32 %v859, %v878
        %vm884 = vc.u32 %v859, %v878
        %v885 = vadd.s32 %v881, 1
        %v886 = vsel %vm884, %v885, %v881
        %v887 = vadd.s32 %v882, %v886
        %v888 = vadd.s32 %v887, 536870912
        %v889 = vshrl.u32 %v888, 30
        %v890 = vshll.u32 %v889, 30
        %v891 = vsub.s32 %v887, %v890
        %vm892 = vcmp.lt.s32.totalorder %v891, 0
        %v893 = vsub.s32 0, %v891
        %v894 = vsel %vm892, %v893, %v891
        %v895 = vclz %v894
        %v896 = vsub.s32 %v895, 2
        %vm897 = vcmp.gt.s32.totalorder 0, %v896
        %v898 = vsel %vm897, 0, %v896
        %v899 = vsub.s32 32, %v898
        %v900 = vshll.u32 %v891, %v898
        %v901 = vshrl.u32 %v883, %v899
        %v902 = vor.u32 %v900, %v901
        %v903 = vsub.s32 4294967266, %v898
        %v904 = vadd.s32 %v903, 127
        %v905 = vshll.u32 %v904, 23
        %v906 = vor.u32 4788187, %v905
        %v907 = vand.u32 2147483647, %v906
        %v909 = vcvt.s32.f32 %v902
        %v910 = vmul.f32 %v909, %v907
        %v911 = vxor.u32 %v910, 2147483648
        %v912 = vsel %vm791, %v911, %v910
        %v913 = vsub.s32 4, %v889
        %v914 = vsel %vm791, %v913, %v889
        %v915 = vsel %vm790, %v634, %v912
        %v916 = vsel %vm790, 0, %v914
        %v917 = vmul.f32 %v915, %v915
        %v918 = vmul.f32 %v917, -0.001358992
        %v919 = vadd.f32 %v918, 0.041655596
        %v920 = vmul.f32 %v917, %v919
        %v921 = vadd.f32 %v920, -0.4999988
        %v922 = vmul.f32 %v917, %v921
        %v923 = vadd.f32 1.0, %v922
        %v924 = vmul.f32 %v915, %v915
        %v925 = vmul.f32 %v924, -0.00019511016
        %v926 = vadd.f32 %v925, 0.008332121
        %v927 = vmul.f32 %v924, %v926
        %v928 = vadd.f32 %v927, -0.16666654
        %v929 = vmul.f32 %v924, %v928
        %v930 = vadd.f32 %v929, 1.0
        %v931 = vmul.f32 %v930, %v915
        %vm932 = vweird.f32 %v634
        %v933 = vand.u32 %v916, 3
        %vm934 = vcmp.lt.s32.totalorder %v933, 2
        %vm935 = vcmp.eq.s32.totalorder %v933, 0
        %v936 = vxor.u32 %v931, 2147483648
        %v937 = vsel %vm935, %v923, %v936
        %vm938 = vcmp.eq.s32.totalorder %v933, 2
        %v939 = vxor.u32 %v923, 2147483648
        %v940 = vsel %vm938, %v939, %v931
        %v941 = vsel %vm934, %v937, %v940
        %v942 = vsel %vm932, nan, %v941
        %v943 = vperm.slane %v278, 2
        %v944 = vmul.f32 %v943, %v788
        %v945 = vmul.f32 %v943, %v942
        %v946 = vand.u32 2147483647, %v633
        %vm947 = vcmp.le.f32.partialorder %v946, 0.7853982
        %vm948 = vcmp.lt.s32.totalorder %v633, 0
        %v949 = vand.u32 %v633, 2139095040
        %v950 = vshrl.u32 %v949, 23
        %v951 = vsub.s32 %v950, 127
        %v952 = vand.u32 2147483647, %v633
        %v953 = vand.u32 %v952, 8388607
        %v954 = vor.u32 %v953, 8388608
        %v955 = vsub.s32 0, %v954
        %v956 = vadd.s32 %v951, 1
        %vm957 = vcmp.gt.s32.totalorder %v956, 0
        %v958 = vsel %vm957, %v956, 0
        %v959 = vshrl.u32 %v958, 5
        %v960 = vand.u32 %v958, 31
        %v961 = vsub.s32 32, %v960
        %v962 = vshrl.u32 683565275, %v961
        %v963 = vshll.u32 683565275, %v960
        %v964 = vshrl.u32 2475754826, %v961
        %v965 = vor.u32 %v963, %v964
        %v966 = vshll.u32 2475754826, %v960
        %v967 = vshrl.u32 2131351028, %v961
        %v968 = vor.u32 %v966, %v967
        %v969 = vshll.u32 2131351028, %v960
        %v970 = vshrl.u32 2102212464, %v961
        %v971 = vor.u32 %v969, %v970
        %v972 = vshll.u32 2102212464, %v960
        %v973 = vshrl.u32 920167782, %v961
        %v974 = vor.u32 %v972, %v973
        %v975 = vshll.u32 920167782, %v960
        %v976 = vshrl.u32 1326507024, %v961
        %v977 = vor.u32 %v975, %v976
        %vm978 = vcmp.lt.s32.totalorder %v959, 1
        %vm979 = vcmp.lt.s32.totalorder %v959, 2
        %vm980 = vcmp.lt.s32.totalorder %v959, 3
        %vm981 = vcmp.lt.s32.totalorder %v959, 4
        %v982 = vsel %vm978, %v962, %v965
        %v983 = vsel %vm981, %v971, 2102212464
        %v984 = vsel %vm980, %v968, %v983
        %v985 = vsel %vm979, %v982, %v984
        %v986 = vsel %vm978, %v965, %v968
        %v987 = vsel %vm981, %v974, 920167782
        %v988 = vsel %vm980, %v971, %v987
        %v989 = vsel %vm979, %v986, %v988
        %v990 = vsel %vm978, %v968, %v971
        %v991 = vsel %vm981, %v977, 1326507024
        %v992 = vsel %vm980, %v974, %v991
        %v993 = vsel %vm979, %v990, %v992
        %v994 = vshll.u32 %v954, 8
        %v995 = vand.u32 %v994, 65535
        %v996 = vshrl.u32 %v994, 16
        %v997 = vand.u32 %v993, 65535
        %v998 = vshrl.u32 %v993, 16
        %v999 = vmul.u32 %v995, %v997
        %v1000 = vmul.u32 %v995, %v998
        %v1001 = vmul.u32 %v996, %v997
        %v1002 = vmul.u32 %v996, %v998
        %v1003 = vshll.u32 %v1000, 16
        %v1004 = vshrl.u32 %v1000, 16
        %v1005 = vshll.u32 %v1001, 16
        %v1006 = vshrl.u32 %v1001, 16
        %vm1007 = vc.u32 %v999, %v1003
        %v1008 = vsel %vm1007, 1, 0
        %v1009 = vadd.s32 %v999, %v1003
        %v1010 = vadd.s32 %v1002, %v1008
        %vm1011 = vc.u32 %v1009, %v1005
        %v1012 = vsel %vm1011, 1, 0
        %v1013 = vadd.s32 %v1009, %v1005
        %v1014 = vadd.s32 %v1010, %v1012
        %v1015 = vadd.s32 %v1014, %v1004
        %v1016 = vadd.s32 %v1015, %v1006
        %v1017 = vand.u32 %v994, 65535
        %v1018 = vshrl.u32 %v994, 16
        %v1019 = vand.u32 %v989, 65535
        %v1020 = vshrl.u32 %v989, 16
        %v1021 = vmul.u32 %v1017, %v1019
        %v1022 = vmul.u32 %v1017, %v1020
        %v1023 = vmul.u32 %v1018, %v1019
        %v1024 = vmul.u32 %v1018, %v1020
        %v1025 = vshll.u32 %v1022, 16
        %v1026 = vshrl.u32 %v1022, 16
        %v1027 = vshll.u32 %v1023, 16
        %v1028 = vshrl.u32 %v1023, 16
        %vm1029 = vc.u32 %v1021, %v1025
        %v1030 = vsel %vm1029, 1, 0
        %v1031 = vadd.s32 %v1021, %v1025
        %v1032 = vadd.s32 %v1024, %v1030
        %vm1033 = vc.u32 %v1031, %v1027
        %v1034 = vsel %vm1033, 1, 0
        %v1035 = vadd.s32 %v1031, %v1027
        %v1036 = vadd.s32 %v1032, %v1034
        %v1037 = vadd.s32 %v1036, %v1026
        %v1038 = vadd.s32 %v1037, %v1028
        %v1039 = vmul.u32 %v994, %v985
        %v1040 = vadd.s32 %v1016, %v1035
        %vm1041 = vc.u32 %v1016, %v1035
        %v1042 = vadd.s32 %v1038, 1
        %v1043 = vsel %vm1041, %v1042, %v1038
        %v1044 = vadd.s32 %v1039, %v1043
        %v1045 = vadd.s32 %v1044, 536870912
        %v1046 = vshrl.u32 %v1045, 30
        %v1047 = vshll.u32 %v1046, 30
        %v1048 = vsub.s32 %v1044, %v1047
        %vm1049 = vcmp.lt.s32.totalorder %v1048, 0
        %v1050 = vsub.s32 0, %v1048
        %v1051 = vsel %vm1049, %v1050, %v1048
        %v1052 = vclz %v1051
        %v1053 = vsub.s32 %v1052, 2
        %vm1054 = vcmp.gt.s32.totalorder 0, %v1053
        %v1055 = vsel %vm1054, 0, %v1053
        %v1056 = vsub.s32 32, %v1055
        %v1057 = vshll.u32 %v1048, %v1055
        %v1058 = vshrl.u32 %v1040, %v1056
        %v1059 = vor.u32 %v1057, %v1058
        %v1060 = vsub.s32 4294967266, %v1055
        %v1061 = vadd.s32 %v1060, 127
        %v1062 = vshll.u32 %v1061, 23
        %v1063 = vor.u32 4788187, %v1062
        %v1064 = vand.u32 2147483647, %v1063
        %v1066 = vcvt.s32.f32 %v1059
        %v1067 = vmul.f32 %v1066, %v1064
        %v1068 = vxor.u32 %v1067, 2147483648
        %v1069 = vsel %vm948, %v1068, %v1067
        %v1070 = vsub.s32 4, %v1046
        %v1071 = vsel %vm948, %v1070, %v1046
        %v1072 = vsel %vm947, %v633, %v1069
        %v1073 = vsel %vm947, 0, %v1071
        %v1074 = vmul.f32 %v1072, %v1072
        %v1075 = vmul.f32 %v1074, -0.001358992
        %v1076 = vadd.f32 %v1075, 0.041655596
        %v1077 = vmul.f32 %v1074, %v1076
        %v1078 = vadd.f32 %v1077, -0.4999988
        %v1079 = vmul.f32 %v1074, %v1078
        %v1080 = vadd.f32 1.0, %v1079
        %v1081 = vmul.f32 %v1072, %v1072
        %v1082 = vmul.f32 %v1081, -0.00019511016
        %v1083 = vadd.f32 %v1082, 0.008332121
        %v1084 = vmul.f32 %v1081, %v1083
        %v1085 = vadd.f32 %v1084, -0.16666654
        %v1086 = vmul.f32 %v1081, %v1085
        %v1087 = vadd.f32 %v1086, 1.0
        %v1088 = vmul.f32 %v1087, %v1072
        %vm1089 = vweird.f32 %v633
        %v1090 = vadd.s32 %v1073, 3
        %v1091 = vand.u32 %v1090, 3
        %vm1092 = vcmp.lt.s32.totalorder %v1091, 2
        %vm1093 = vcmp.eq.s32.totalorder %v1091, 0
        %v1094 = vxor.u32 %v1088, 2147483648
        %v1095 = vsel %vm1093, %v1080, %v1094
        %vm1096 = vcmp.eq.s32.totalorder %v1091, 2
        %v1097 = vxor.u32 %v1080, 2147483648
        %v1098 = vsel %vm1096, %v1097, %v1088
        %v1099 = vsel %vm1092, %v1095, %v1098
        %v1100 = vsel %vm1089, nan, %v1099
        %v1101 = vand.u32 2147483647, %v634
        %vm1102 = vcmp.le.f32.partialorder %v1101, 0.7853982
        %vm1103 = vcmp.lt.s32.totalorder %v634, 0
        %v1104 = vand.u32 %v634, 2139095040
        %v1105 = vshrl.u32 %v1104, 23
        %v1106 = vsub.s32 %v1105, 127
        %v1107 = vand.u32 2147483647, %v634
        %v1108 = vand.u32 %v1107, 8388607
        %v1109 = vor.u32 %v1108, 8388608
        %v1110 = vsub.s32 0, %v1109
        %v1111 = vadd.s32 %v1106, 1
        %vm1112 = vcmp.gt.s32.totalorder %v1111, 0
        %v1113 = vsel %vm1112, %v1111, 0
        %v1114 = vshrl.u32 %v1113, 5
        %v1115 = vand.u32 %v1113, 31
        %v1116 = vsub.s32 32, %v1115
        %v1117 = vshrl.u32 683565275, %v1116
        %v1118 = vshll.u32 683565275, %v1115
        %v1119 = vshrl.u32 2475754826, %v1116
        %v1120 = vor.u32 %v1118, %v1119
        %v1121 = vshll.u32 2475754826, %v1115
        %v1122 = vshrl.u32 2131351028, %v1116
        %v1123 = vor.u32 %v1121, %v1122
        %v1124 = vshll.u32 2131351028, %v1115
        %v1125 = vshrl.u32 2102212464, %v1116
        %v1126 = vor.u32 %v1124, %v1125
        %v1127 = vshll.u32 2102212464, %v1115
        %v1128 = vshrl.u32 920167782, %v1116
        %v1129 = vor.u32 %v1127, %v1128
        %v1130 = vshll.u32 920167782, %v1115
        %v1131 = vshrl.u32 1326507024, %v1116
        %v1132 = vor.u32 %v1130, %v1131
        %vm1133 = vcmp.lt.s32.totalorder %v1114, 1
        %vm1134 = vcmp.lt.s32.totalorder %v1114, 2
        %vm1135 = vcmp.lt.s32.totalorder %v1114, 3
        %vm1136 = vcmp.lt.s32.totalorder %v1114, 4
        %v1137 = vsel %vm1133, %v1117, %v1120
        %v1138 = vsel %vm1136, %v1126, 2102212464
        %v1139 = vsel %vm1135, %v1123, %v1138
        %v1140 = vsel %vm1134, %v1137, %v1139
        %v1141 = vsel %vm1133, %v1120, %v1123
        %v1142 = vsel %vm1136, %v1129, 920167782
        %v1143 = vsel %vm1135, %v1126, %v1142
        %v1144 = vsel %vm1134, %v1141, %v1143
        %v1145 = vsel %vm1133, %v1123, %v1126
        %v1146 = vsel %vm1136, %v1132, 1326507024
        %v1147 = vsel %vm1135, %v1129, %v1146
        %v1148 = vsel %vm1134, %v1145, %v1147
        %v1149 = vshll.u32 %v1109, 8
        %v1150 = vand.u32 %v1149, 65535
        %v1151 = vshrl.u32 %v1149, 16
        %v1152 = vand.u32 %v1148, 65535
        %v1153 = vshrl.u32 %v1148, 16
        %v1154 = vmul.u32 %v1150, %v1152
        %v1155 = vmul.u32 %v1150, %v1153
        %v1156 = vmul.u32 %v1151, %v1152
        %v1157 = vmul.u32 %v1151, %v1153
        %v1158 = vshll.u32 %v1155, 16
        %v1159 = vshrl.u32 %v1155, 16
        %v1160 = vshll.u32 %v1156, 16
        %v1161 = vshrl.u32 %v1156, 16
        %vm1162 = vc.u32 %v1154, %v1158
        %v1163 = vsel %vm1162, 1, 0
        %v1164 = vadd.s32 %v1154, %v1158
        %v1165 = vadd.s32 %v1157, %v1163
        %vm1166 = vc.u32 %v1164, %v1160
        %v1167 = vsel %vm1166, 1, 0
        %v1168 = vadd.s32 %v1164, %v1160
        %v1169 = vadd.s32 %v1165, %v1167
        %v1170 = vadd.s32 %v1169, %v1159
        %v1171 = vadd.s32 %v1170, %v1161
        %v1172 = vand.u32 %v1149, 65535
        %v1173 = vshrl.u32 %v1149, 16
        %v1174 = vand.u32 %v1144, 65535
        %v1175 = vshrl.u32 %v1144, 16
        %v1176 = vmul.u32 %v1172, %v1174
        %v1177 = vmul.u32 %v1172, %v1175
        %v1178 = vmul.u32 %v1173, %v1174
        %v1179 = vmul.u32 %v1173, %v1175
        %v1180 = vshll.u32 %v1177, 16
        %v1181 = vshrl.u32 %v1177, 16
        %v1182 = vshll.u32 %v1178, 16
        %v1183 = vshrl.u32 %v1178, 16
        %vm1184 = vc.u32 %v1176, %v1180
        %v1185 = vsel %vm1184, 1, 0
        %v1186 = vadd.s32 %v1176, %v1180
        %v1187 = vadd.s32 %v1179, %v1185
        %vm1188 = vc.u32 %v1186, %v1182
        %v1189 = vsel %vm1188, 1, 0
        %v1190 = vadd.s32 %v1186, %v1182
        %v1191 = vadd.s32 %v1187, %v1189
        %v1192 = vadd.s32 %v1191, %v1181
        %v1193 = vadd.s32 %v1192, %v1183
        %v1194 = vmul.u32 %v1149, %v1140
        %v1195 = vadd.s32 %v1171, %v1190
        %vm1196 = vc.u32 %v1171, %v1190
        %v1197 = vadd.s32 %v1193, 1
        %v1198 = vsel %vm1196, %v1197, %v1193
        %v1199 = vadd.s32 %v1194, %v1198
        %v1200 = vadd.s32 %v1199, 536870912
        %v1201 = vshrl.u32 %v1200, 30
        %v1202 = vshll.u32 %v1201, 30
        %v1203 = vsub.s32 %v1199, %v1202
        %vm1204 = vcmp.lt.s32.totalorder %v1203, 0
        %v1205 = vsub.s32 0, %v1203
        %v1206 = vsel %vm1204, %v1205, %v1203
        %v1207 = vclz %v1206
        %v1208 = vsub.s32 %v1207, 2
        %vm1209 = vcmp.gt.s32.totalorder 0, %v1208
        %v1210 = vsel %vm1209, 0, %v1208
        %v1211 = vsub.s32 32, %v1210
        %v1212 = vshll.u32 %v1203, %v1210
        %v1213 = vshrl.u32 %v1195, %v1211
        %v1214 = vor.u32 %v1212, %v1213
        %v1215 = vsub.s32 4294967266, %v1210
        %v1216 = vadd.s32 %v1215, 127
        %v1217 = vshll.u32 %v1216, 23
        %v1218 = vor.u32 4788187, %v1217
        %v1219 = vand.u32 2147483647, %v1218
        %v1221 = vcvt.s32.f32 %v1214
        %v1222 = vmul.f32 %v1221, %v1219
        %v1223 = vxor.u32 %v1222, 2147483648
        %v1224 = vsel %vm1103, %v1223, %v1222
        %v1225 = vsub.s32 4, %v1201
        %v1226 = vsel %vm1103, %v1225, %v1201
        %v1227 = vsel %vm1102, %v634, %v1224
        %v1228 = vsel %vm1102, 0, %v1226
        %v1229 = vmul.f32 %v1227, %v1227
        %v1230 = vmul.f32 %v1229, -0.001358992
        %v1231 = vadd.f32 %v1230, 0.041655596
        %v1232 = vmul.f32 %v1229, %v1231
        %v1233 = vadd.f32 %v1232, -0.4999988
        %v1234 = vmul.f32 %v1229, %v1233
        %v1235 = vadd.f32 1.0, %v1234
        %v1236 = vmul.f32 %v1227, %v1227
        %v1237 = vmul.f32 %v1236, -0.00019511016
        %v1238 = vadd.f32 %v1237, 0.008332121
        %v1239 = vmul.f32 %v1236, %v1238
        %v1240 = vadd.f32 %v1239, -0.16666654
        %v1241 = vmul.f32 %v1236, %v1240
        %v1242 = vadd.f32 %v1241, 1.0
        %v1243 = vmul.f32 %v1242, %v1227
        %vm1244 = vweird.f32 %v634
        %v1245 = vadd.s32 %v1228, 3
        %v1246 = vand.u32 %v1245, 3
        %vm1247 = vcmp.lt.s32.totalorder %v1246, 2
        %vm1248 = vcmp.eq.s32.totalorder %v1246, 0
        %v1249 = vxor.u32 %v1243, 2147483648
        %v1250 = vsel %vm1248, %v1235, %v1249
        %vm1251 = vcmp.eq.s32.totalorder %v1246, 2
        %v1252 = vxor.u32 %v1235, 2147483648
        %v1253 = vsel %vm1251, %v1252, %v1243
        %v1254 = vsel %vm1247, %v1250, %v1253
        %v1255 = vsel %vm1244, nan, %v1254
        %v1256 = vperm.slane %v278, 3
        %v1257 = vmul.f32 %v1256, %v1100
        %v1258 = vmul.f32 %v1256, %v1255
        %v1259 = vadd.f32 %v944, %v1257
        %v1260 = vadd.f32 %v945, %v1258
        %v1261 = vmul.f32 %v629, %v1259
        %v1262 = vmul.f32 %v631, %v1260
        %v1263 = vpack.c.bf16 %v1261, %v1261
        %v1264 = vpack.c.bf16 %v1262, %v1262
        %vm1265 = vcmask 60416
        %1266 = vst.msk [vmem:[#allocation4] sm:$0xf] %vm1265, %v1263
        %1267 = vst.msk [vmem:[#allocation4 + $0x4] sm:$0xf] %vm1265, %v1264
        %v1268 = vsub.f32 8.0, %v285
        %v1269 = vsub.f32 8.0, %v286
        %v1270 = vmul.f32 %v1268, %v625
        %v1271 = vmul.f32 %v1269, %v625
        %v1272 = vmul.f32 %v1270, 1.442695
        %v1273 = vpow.pop %v1272
        %v1274 = vmul.f32 %v1271, 1.442695
        %v1275 = vpow.pop %v1274
        %v1276 = vmul.f32 %v1268, %v632
        %v1277 = vmul.f32 %v1269, %v632
        %v1278 = vand.u32 2147483647, %v1276
        %vm1279 = vcmp.le.f32.partialorder %v1278, 0.7853982
        %vm1280 = vcmp.lt.s32.totalorder %v1276, 0
        %v1281 = vand.u32 %v1276, 2139095040
        %v1282 = vshrl.u32 %v1281, 23
        %v1283 = vsub.s32 %v1282, 127
        %v1284 = vand.u32 2147483647, %v1276
        %v1285 = vand.u32 %v1284, 8388607
        %v1286 = vor.u32 %v1285, 8388608
        %v1287 = vsub.s32 0, %v1286
        %v1288 = vadd.s32 %v1283, 1
        %vm1289 = vcmp.gt.s32.totalorder %v1288, 0
        %v1290 = vsel %vm1289, %v1288, 0
        %v1291 = vshrl.u32 %v1290, 5
        %v1292 = vand.u32 %v1290, 31
        %v1293 = vsub.s32 32, %v1292
        %v1294 = vshrl.u32 683565275, %v1293
        %v1295 = vshll.u32 683565275, %v1292
        %v1296 = vshrl.u32 2475754826, %v1293
        %v1297 = vor.u32 %v1295, %v1296
        %v1298 = vshll.u32 2475754826, %v1292
        %v1299 = vshrl.u32 2131351028, %v1293
        %v1300 = vor.u32 %v1298, %v1299
        %v1301 = vshll.u32 2131351028, %v1292
        %v1302 = vshrl.u32 2102212464, %v1293
        %v1303 = vor.u32 %v1301, %v1302
        %v1304 = vshll.u32 2102212464, %v1292
        %v1305 = vshrl.u32 920167782, %v1293
        %v1306 = vor.u32 %v1304, %v1305
        %v1307 = vshll.u32 920167782, %v1292
        %v1308 = vshrl.u32 1326507024, %v1293
        %v1309 = vor.u32 %v1307, %v1308
        %vm1310 = vcmp.lt.s32.totalorder %v1291, 1
        %vm1311 = vcmp.lt.s32.totalorder %v1291, 2
        %vm1312 = vcmp.lt.s32.totalorder %v1291, 3
        %vm1313 = vcmp.lt.s32.totalorder %v1291, 4
        %v1314 = vsel %vm1310, %v1294, %v1297
        %v1315 = vsel %vm1313, %v1303, 2102212464
        %v1316 = vsel %vm1312, %v1300, %v1315
        %v1317 = vsel %vm1311, %v1314, %v1316
        %v1318 = vsel %vm1310, %v1297, %v1300
        %v1319 = vsel %vm1313, %v1306, 920167782
        %v1320 = vsel %vm1312, %v1303, %v1319
        %v1321 = vsel %vm1311, %v1318, %v1320
        %v1322 = vsel %vm1310, %v1300, %v1303
        %v1323 = vsel %vm1313, %v1309, 1326507024
        %v1324 = vsel %vm1312, %v1306, %v1323
        %v1325 = vsel %vm1311, %v1322, %v1324
        %v1326 = vshll.u32 %v1286, 8
        %v1327 = vand.u32 %v1326, 65535
        %v1328 = vshrl.u32 %v1326, 16
        %v1329 = vand.u32 %v1325, 65535
        %v1330 = vshrl.u32 %v1325, 16
        %v1331 = vmul.u32 %v1327, %v1329
        %v1332 = vmul.u32 %v1327, %v1330
        %v1333 = vmul.u32 %v1328, %v1329
        %v1334 = vmul.u32 %v1328, %v1330
        %v1335 = vshll.u32 %v1332, 16
        %v1336 = vshrl.u32 %v1332, 16
        %v1337 = vshll.u32 %v1333, 16
        %v1338 = vshrl.u32 %v1333, 16
        %vm1339 = vc.u32 %v1331, %v1335
        %v1340 = vsel %vm1339, 1, 0
        %v1341 = vadd.s32 %v1331, %v1335
        %v1342 = vadd.s32 %v1334, %v1340
        %vm1343 = vc.u32 %v1341, %v1337
        %v1344 = vsel %vm1343, 1, 0
        %v1345 = vadd.s32 %v1341, %v1337
        %v1346 = vadd.s32 %v1342, %v1344
        %v1347 = vadd.s32 %v1346, %v1336
        %v1348 = vadd.s32 %v1347, %v1338
        %v1349 = vand.u32 %v1326, 65535
        %v1350 = vshrl.u32 %v1326, 16
        %v1351 = vand.u32 %v1321, 65535
        %v1352 = vshrl.u32 %v1321, 16
        %v1353 = vmul.u32 %v1349, %v1351
        %v1354 = vmul.u32 %v1349, %v1352
        %v1355 = vmul.u32 %v1350, %v1351
        %v1356 = vmul.u32 %v1350, %v1352
        %v1357 = vshll.u32 %v1354, 16
        %v1358 = vshrl.u32 %v1354, 16
        %v1359 = vshll.u32 %v1355, 16
        %v1360 = vshrl.u32 %v1355, 16
        %vm1361 = vc.u32 %v1353, %v1357
        %v1362 = vsel %vm1361, 1, 0
        %v1363 = vadd.s32 %v1353, %v1357
        %v1364 = vadd.s32 %v1356, %v1362
        %vm1365 = vc.u32 %v1363, %v1359
        %v1366 = vsel %vm1365, 1, 0
        %v1367 = vadd.s32 %v1363, %v1359
        %v1368 = vadd.s32 %v1364, %v1366
        %v1369 = vadd.s32 %v1368, %v1358
        %v1370 = vadd.s32 %v1369, %v1360
        %v1371 = vmul.u32 %v1326, %v1317
        %v1372 = vadd.s32 %v1348, %v1367
        %vm1373 = vc.u32 %v1348, %v1367
        %v1374 = vadd.s32 %v1370, 1
        %v1375 = vsel %vm1373, %v1374, %v1370
        %v1376 = vadd.s32 %v1371, %v1375
        %v1377 = vadd.s32 %v1376, 536870912
        %v1378 = vshrl.u32 %v1377, 30
        %v1379 = vshll.u32 %v1378, 30
        %v1380 = vsub.s32 %v1376, %v1379
        %vm1381 = vcmp.lt.s32.totalorder %v1380, 0
        %v1382 = vsub.s32 0, %v1380
        %v1383 = vsel %vm1381, %v1382, %v1380
        %v1384 = vclz %v1383
        %v1385 = vsub.s32 %v1384, 2
        %vm1386 = vcmp.gt.s32.totalorder 0, %v1385
        %v1387 = vsel %vm1386, 0, %v1385
        %v1388 = vsub.s32 32, %v1387
        %v1389 = vshll.u32 %v1380, %v1387
        %v1390 = vshrl.u32 %v1372, %v1388
        %v1391 = vor.u32 %v1389, %v1390
        %v1392 = vsub.s32 4294967266, %v1387
        %v1393 = vadd.s32 %v1392, 127
        %v1394 = vshll.u32 %v1393, 23
        %v1395 = vor.u32 4788187, %v1394
        %v1396 = vand.u32 2147483647, %v1395
        %v1398 = vcvt.s32.f32 %v1391
        %v1399 = vmul.f32 %v1398, %v1396
        %v1400 = vxor.u32 %v1399, 2147483648
        %v1401 = vsel %vm1280, %v1400, %v1399
        %v1402 = vsub.s32 4, %v1378
        %v1403 = vsel %vm1280, %v1402, %v1378
        %v1404 = vsel %vm1279, %v1276, %v1401
        %v1405 = vsel %vm1279, 0, %v1403
        %v1406 = vmul.f32 %v1404, %v1404
        %v1407 = vmul.f32 %v1406, -0.001358992
        %v1408 = vadd.f32 %v1407, 0.041655596
        %v1409 = vmul.f32 %v1406, %v1408
        %v1410 = vadd.f32 %v1409, -0.4999988
        %v1411 = vmul.f32 %v1406, %v1410
        %v1412 = vadd.f32 1.0, %v1411
        %v1413 = vmul.f32 %v1404, %v1404
        %v1414 = vmul.f32 %v1413, -0.00019511016
        %v1415 = vadd.f32 %v1414, 0.008332121
        %v1416 = vmul.f32 %v1413, %v1415
        %v1417 = vadd.f32 %v1416, -0.16666654
        %v1418 = vmul.f32 %v1413, %v1417
        %v1419 = vadd.f32 %v1418, 1.0
        %v1420 = vmul.f32 %v1419, %v1404
        %vm1421 = vweird.f32 %v1276
        %v1422 = vand.u32 %v1405, 3
        %vm1423 = vcmp.lt.s32.totalorder %v1422, 2
        %vm1424 = vcmp.eq.s32.totalorder %v1422, 0
        %v1425 = vxor.u32 %v1420, 2147483648
        %v1426 = vsel %vm1424, %v1412, %v1425
        %vm1427 = vcmp.eq.s32.totalorder %v1422, 2
        %v1428 = vxor.u32 %v1412, 2147483648
        %v1429 = vsel %vm1427, %v1428, %v1420
        %v1430 = vsel %vm1423, %v1426, %v1429
        %v1431 = vsel %vm1421, nan, %v1430
        %v1432 = vand.u32 2147483647, %v1277
        %vm1433 = vcmp.le.f32.partialorder %v1432, 0.7853982
        %vm1434 = vcmp.lt.s32.totalorder %v1277, 0
        %v1435 = vand.u32 %v1277, 2139095040
        %v1436 = vshrl.u32 %v1435, 23
        %v1437 = vsub.s32 %v1436, 127
        %v1438 = vand.u32 2147483647, %v1277
        %v1439 = vand.u32 %v1438, 8388607
        %v1440 = vor.u32 %v1439, 8388608
        %v1441 = vsub.s32 0, %v1440
        %v1442 = vadd.s32 %v1437, 1
        %vm1443 = vcmp.gt.s32.totalorder %v1442, 0
        %v1444 = vsel %vm1443, %v1442, 0
        %v1445 = vshrl.u32 %v1444, 5
        %v1446 = vand.u32 %v1444, 31
        %v1447 = vsub.s32 32, %v1446
        %v1448 = vshrl.u32 683565275, %v1447
        %v1449 = vshll.u32 683565275, %v1446
        %v1450 = vshrl.u32 2475754826, %v1447
        %v1451 = vor.u32 %v1449, %v1450
        %v1452 = vshll.u32 2475754826, %v1446
        %v1453 = vshrl.u32 2131351028, %v1447
        %v1454 = vor.u32 %v1452, %v1453
        %v1455 = vshll.u32 2131351028, %v1446
        %v1456 = vshrl.u32 2102212464, %v1447
        %v1457 = vor.u32 %v1455, %v1456
        %v1458 = vshll.u32 2102212464, %v1446
        %v1459 = vshrl.u32 920167782, %v1447
        %v1460 = vor.u32 %v1458, %v1459
        %v1461 = vshll.u32 920167782, %v1446
        %v1462 = vshrl.u32 1326507024, %v1447
        %v1463 = vor.u32 %v1461, %v1462
        %vm1464 = vcmp.lt.s32.totalorder %v1445, 1
        %vm1465 = vcmp.lt.s32.totalorder %v1445, 2
        %vm1466 = vcmp.lt.s32.totalorder %v1445, 3
        %vm1467 = vcmp.lt.s32.totalorder %v1445, 4
        %v1468 = vsel %vm1464, %v1448, %v1451
        %v1469 = vsel %vm1467, %v1457, 2102212464
        %v1470 = vsel %vm1466, %v1454, %v1469
        %v1471 = vsel %vm1465, %v1468, %v1470
        %v1472 = vsel %vm1464, %v1451, %v1454
        %v1473 = vsel %vm1467, %v1460, 920167782
        %v1474 = vsel %vm1466, %v1457, %v1473
        %v1475 = vsel %vm1465, %v1472, %v1474
        %v1476 = vsel %vm1464, %v1454, %v1457
        %v1477 = vsel %vm1467, %v1463, 1326507024
        %v1478 = vsel %vm1466, %v1460, %v1477
        %v1479 = vsel %vm1465, %v1476, %v1478
        %v1480 = vshll.u32 %v1440, 8
        %v1481 = vand.u32 %v1480, 65535
        %v1482 = vshrl.u32 %v1480, 16
        %v1483 = vand.u32 %v1479, 65535
        %v1484 = vshrl.u32 %v1479, 16
        %v1485 = vmul.u32 %v1481, %v1483
        %v1486 = vmul.u32 %v1481, %v1484
        %v1487 = vmul.u32 %v1482, %v1483
        %v1488 = vmul.u32 %v1482, %v1484
        %v1489 = vshll.u32 %v1486, 16
        %v1490 = vshrl.u32 %v1486, 16
        %v1491 = vshll.u32 %v1487, 16
        %v1492 = vshrl.u32 %v1487, 16
        %vm1493 = vc.u32 %v1485, %v1489
        %v1494 = vsel %vm1493, 1, 0
        %v1495 = vadd.s32 %v1485, %v1489
        %v1496 = vadd.s32 %v1488, %v1494
        %vm1497 = vc.u32 %v1495, %v1491
        %v1498 = vsel %vm1497, 1, 0
        %v1499 = vadd.s32 %v1495, %v1491
        %v1500 = vadd.s32 %v1496, %v1498
        %v1501 = vadd.s32 %v1500, %v1490
        %v1502 = vadd.s32 %v1501, %v1492
        %v1503 = vand.u32 %v1480, 65535
        %v1504 = vshrl.u32 %v1480, 16
        %v1505 = vand.u32 %v1475, 65535
        %v1506 = vshrl.u32 %v1475, 16
        %v1507 = vmul.u32 %v1503, %v1505
        %v1508 = vmul.u32 %v1503, %v1506
        %v1509 = vmul.u32 %v1504, %v1505
        %v1510 = vmul.u32 %v1504, %v1506
        %v1511 = vshll.u32 %v1508, 16
        %v1512 = vshrl.u32 %v1508, 16
        %v1513 = vshll.u32 %v1509, 16
        %v1514 = vshrl.u32 %v1509, 16
        %vm1515 = vc.u32 %v1507, %v1511
        %v1516 = vsel %vm1515, 1, 0
        %v1517 = vadd.s32 %v1507, %v1511
        %v1518 = vadd.s32 %v1510, %v1516
        %vm1519 = vc.u32 %v1517, %v1513
        %v1520 = vsel %vm1519, 1, 0
        %v1521 = vadd.s32 %v1517, %v1513
        %v1522 = vadd.s32 %v1518, %v1520
        %v1523 = vadd.s32 %v1522, %v1512
        %v1524 = vadd.s32 %v1523, %v1514
        %v1525 = vmul.u32 %v1480, %v1471
        %v1526 = vadd.s32 %v1502, %v1521
        %vm1527 = vc.u32 %v1502, %v1521
        %v1528 = vadd.s32 %v1524, 1
        %v1529 = vsel %vm1527, %v1528, %v1524
        %v1530 = vadd.s32 %v1525, %v1529
        %v1531 = vadd.s32 %v1530, 536870912
        %v1532 = vshrl.u32 %v1531, 30
        %v1533 = vshll.u32 %v1532, 30
        %v1534 = vsub.s32 %v1530, %v1533
        %vm1535 = vcmp.lt.s32.totalorder %v1534, 0
        %v1536 = vsub.s32 0, %v1534
        %v1537 = vsel %vm1535, %v1536, %v1534
        %v1538 = vclz %v1537
        %v1539 = vsub.s32 %v1538, 2
        %vm1540 = vcmp.gt.s32.totalorder 0, %v1539
        %v1541 = vsel %vm1540, 0, %v1539
        %v1542 = vsub.s32 32, %v1541
        %v1543 = vshll.u32 %v1534, %v1541
        %v1544 = vshrl.u32 %v1526, %v1542
        %v1545 = vor.u32 %v1543, %v1544
        %v1546 = vsub.s32 4294967266, %v1541
        %v1547 = vadd.s32 %v1546, 127
        %v1548 = vshll.u32 %v1547, 23
        %v1549 = vor.u32 4788187, %v1548
        %v1550 = vand.u32 2147483647, %v1549
        %v1552 = vcvt.s32.f32 %v1545
        %v1553 = vmul.f32 %v1552, %v1550
        %v1554 = vxor.u32 %v1553, 2147483648
        %v1555 = vsel %vm1434, %v1554, %v1553
        %v1556 = vsub.s32 4, %v1532
        %v1557 = vsel %vm1434, %v1556, %v1532
        %v1558 = vsel %vm1433, %v1277, %v1555
        %v1559 = vsel %vm1433, 0, %v1557
        %v1560 = vmul.f32 %v1558, %v1558
        %v1561 = vmul.f32 %v1560, -0.001358992
        %v1562 = vadd.f32 %v1561, 0.041655596
        %v1563 = vmul.f32 %v1560, %v1562
        %v1564 = vadd.f32 %v1563, -0.4999988
        %v1565 = vmul.f32 %v1560, %v1564
        %v1566 = vadd.f32 1.0, %v1565
        %v1567 = vmul.f32 %v1558, %v1558
        %v1568 = vmul.f32 %v1567, -0.00019511016
        %v1569 = vadd.f32 %v1568, 0.008332121
        %v1570 = vmul.f32 %v1567, %v1569
        %v1571 = vadd.f32 %v1570, -0.16666654
        %v1572 = vmul.f32 %v1567, %v1571
        %v1573 = vadd.f32 %v1572, 1.0
        %v1574 = vmul.f32 %v1573, %v1558
        %vm1575 = vweird.f32 %v1277
        %v1576 = vand.u32 %v1559, 3
        %vm1577 = vcmp.lt.s32.totalorder %v1576, 2
        %vm1578 = vcmp.eq.s32.totalorder %v1576, 0
        %v1579 = vxor.u32 %v1574, 2147483648
        %v1580 = vsel %vm1578, %v1566, %v1579
        %vm1581 = vcmp.eq.s32.totalorder %v1576, 2
        %v1582 = vxor.u32 %v1566, 2147483648
        %v1583 = vsel %vm1581, %v1582, %v1574
        %v1584 = vsel %vm1577, %v1580, %v1583
        %v1585 = vsel %vm1575, nan, %v1584
        %v1586 = vmul.f32 %v943, %v1431
        %v1587 = vmul.f32 %v943, %v1585
        %v1588 = vand.u32 2147483647, %v1276
        %vm1589 = vcmp.le.f32.partialorder %v1588, 0.7853982
        %vm1590 = vcmp.lt.s32.totalorder %v1276, 0
        %v1591 = vand.u32 %v1276, 2139095040
        %v1592 = vshrl.u32 %v1591, 23
        %v1593 = vsub.s32 %v1592, 127
        %v1594 = vand.u32 2147483647, %v1276
        %v1595 = vand.u32 %v1594, 8388607
        %v1596 = vor.u32 %v1595, 8388608
        %v1597 = vsub.s32 0, %v1596
        %v1598 = vadd.s32 %v1593, 1
        %vm1599 = vcmp.gt.s32.totalorder %v1598, 0
        %v1600 = vsel %vm1599, %v1598, 0
        %v1601 = vshrl.u32 %v1600, 5
        %v1602 = vand.u32 %v1600, 31
        %v1603 = vsub.s32 32, %v1602
        %v1604 = vshrl.u32 683565275, %v1603
        %v1605 = vshll.u32 683565275, %v1602
        %v1606 = vshrl.u32 2475754826, %v1603
        %v1607 = vor.u32 %v1605, %v1606
        %v1608 = vshll.u32 2475754826, %v1602
        %v1609 = vshrl.u32 2131351028, %v1603
        %v1610 = vor.u32 %v1608, %v1609
        %v1611 = vshll.u32 2131351028, %v1602
        %v1612 = vshrl.u32 2102212464, %v1603
        %v1613 = vor.u32 %v1611, %v1612
        %v1614 = vshll.u32 2102212464, %v1602
        %v1615 = vshrl.u32 920167782, %v1603
        %v1616 = vor.u32 %v1614, %v1615
        %v1617 = vshll.u32 920167782, %v1602
        %v1618 = vshrl.u32 1326507024, %v1603
        %v1619 = vor.u32 %v1617, %v1618
        %vm1620 = vcmp.lt.s32.totalorder %v1601, 1
        %vm1621 = vcmp.lt.s32.totalorder %v1601, 2
        %vm1622 = vcmp.lt.s32.totalorder %v1601, 3
        %vm1623 = vcmp.lt.s32.totalorder %v1601, 4
        %v1624 = vsel %vm1620, %v1604, %v1607
        %v1625 = vsel %vm1623, %v1613, 2102212464
        %v1626 = vsel %vm1622, %v1610, %v1625
        %v1627 = vsel %vm1621, %v1624, %v1626
        %v1628 = vsel %vm1620, %v1607, %v1610
        %v1629 = vsel %vm1623, %v1616, 920167782
        %v1630 = vsel %vm1622, %v1613, %v1629
        %v1631 = vsel %vm1621, %v1628, %v1630
        %v1632 = vsel %vm1620, %v1610, %v1613
        %v1633 = vsel %vm1623, %v1619, 1326507024
        %v1634 = vsel %vm1622, %v1616, %v1633
        %v1635 = vsel %vm1621, %v1632, %v1634
        %v1636 = vshll.u32 %v1596, 8
        %v1637 = vand.u32 %v1636, 65535
        %v1638 = vshrl.u32 %v1636, 16
        %v1639 = vand.u32 %v1635, 65535
        %v1640 = vshrl.u32 %v1635, 16
        %v1641 = vmul.u32 %v1637, %v1639
        %v1642 = vmul.u32 %v1637, %v1640
        %v1643 = vmul.u32 %v1638, %v1639
        %v1644 = vmul.u32 %v1638, %v1640
        %v1645 = vshll.u32 %v1642, 16
        %v1646 = vshrl.u32 %v1642, 16
        %v1647 = vshll.u32 %v1643, 16
        %v1648 = vshrl.u32 %v1643, 16
        %vm1649 = vc.u32 %v1641, %v1645
        %v1650 = vsel %vm1649, 1, 0
        %v1651 = vadd.s32 %v1641, %v1645
        %v1652 = vadd.s32 %v1644, %v1650
        %vm1653 = vc.u32 %v1651, %v1647
        %v1654 = vsel %vm1653, 1, 0
        %v1655 = vadd.s32 %v1651, %v1647
        %v1656 = vadd.s32 %v1652, %v1654
        %v1657 = vadd.s32 %v1656, %v1646
        %v1658 = vadd.s32 %v1657, %v1648
        %v1659 = vand.u32 %v1636, 65535
        %v1660 = vshrl.u32 %v1636, 16
        %v1661 = vand.u32 %v1631, 65535
        %v1662 = vshrl.u32 %v1631, 16
        %v1663 = vmul.u32 %v1659, %v1661
        %v1664 = vmul.u32 %v1659, %v1662
        %v1665 = vmul.u32 %v1660, %v1661
        %v1666 = vmul.u32 %v1660, %v1662
        %v1667 = vshll.u32 %v1664, 16
        %v1668 = vshrl.u32 %v1664, 16
        %v1669 = vshll.u32 %v1665, 16
        %v1670 = vshrl.u32 %v1665, 16
        %vm1671 = vc.u32 %v1663, %v1667
        %v1672 = vsel %vm1671, 1, 0
        %v1673 = vadd.s32 %v1663, %v1667
        %v1674 = vadd.s32 %v1666, %v1672
        %vm1675 = vc.u32 %v1673, %v1669
        %v1676 = vsel %vm1675, 1, 0
        %v1677 = vadd.s32 %v1673, %v1669
        %v1678 = vadd.s32 %v1674, %v1676
        %v1679 = vadd.s32 %v1678, %v1668
        %v1680 = vadd.s32 %v1679, %v1670
        %v1681 = vmul.u32 %v1636, %v1627
        %v1682 = vadd.s32 %v1658, %v1677
        %vm1683 = vc.u32 %v1658, %v1677
        %v1684 = vadd.s32 %v1680, 1
        %v1685 = vsel %vm1683, %v1684, %v1680
        %v1686 = vadd.s32 %v1681, %v1685
        %v1687 = vadd.s32 %v1686, 536870912
        %v1688 = vshrl.u32 %v1687, 30
        %v1689 = vshll.u32 %v1688, 30
        %v1690 = vsub.s32 %v1686, %v1689
        %vm1691 = vcmp.lt.s32.totalorder %v1690, 0
        %v1692 = vsub.s32 0, %v1690
        %v1693 = vsel %vm1691, %v1692, %v1690
        %v1694 = vclz %v1693
        %v1695 = vsub.s32 %v1694, 2
        %vm1696 = vcmp.gt.s32.totalorder 0, %v1695
        %v1697 = vsel %vm1696, 0, %v1695
        %v1698 = vsub.s32 32, %v1697
        %v1699 = vshll.u32 %v1690, %v1697
        %v1700 = vshrl.u32 %v1682, %v1698
        %v1701 = vor.u32 %v1699, %v1700
        %v1702 = vsub.s32 4294967266, %v1697
        %v1703 = vadd.s32 %v1702, 127
        %v1704 = vshll.u32 %v1703, 23
        %v1705 = vor.u32 4788187, %v1704
        %v1706 = vand.u32 2147483647, %v1705
        %v1708 = vcvt.s32.f32 %v1701
        %v1709 = vmul.f32 %v1708, %v1706
        %v1710 = vxor.u32 %v1709, 2147483648
        %v1711 = vsel %vm1590, %v1710, %v1709
        %v1712 = vsub.s32 4, %v1688
        %v1713 = vsel %vm1590, %v1712, %v1688
        %v1714 = vsel %vm1589, %v1276, %v1711
        %v1715 = vsel %vm1589, 0, %v1713
        %v1716 = vmul.f32 %v1714, %v1714
        %v1717 = vmul.f32 %v1716, -0.001358992
        %v1718 = vadd.f32 %v1717, 0.041655596
        %v1719 = vmul.f32 %v1716, %v1718
        %v1720 = vadd.f32 %v1719, -0.4999988
        %v1721 = vmul.f32 %v1716, %v1720
        %v1722 = vadd.f32 1.0, %v1721
        %v1723 = vmul.f32 %v1714, %v1714
        %v1724 = vmul.f32 %v1723, -0.00019511016
        %v1725 = vadd.f32 %v1724, 0.008332121
        %v1726 = vmul.f32 %v1723, %v1725
        %v1727 = vadd.f32 %v1726, -0.16666654
        %v1728 = vmul.f32 %v1723, %v1727
        %v1729 = vadd.f32 %v1728, 1.0
        %v1730 = vmul.f32 %v1729, %v1714
        %vm1731 = vweird.f32 %v1276
        %v1732 = vadd.s32 %v1715, 3
        %v1733 = vand.u32 %v1732, 3
        %vm1734 = vcmp.lt.s32.totalorder %v1733, 2
        %vm1735 = vcmp.eq.s32.totalorder %v1733, 0
        %v1736 = vxor.u32 %v1730, 2147483648
        %v1737 = vsel %vm1735, %v1722, %v1736
        %vm1738 = vcmp.eq.s32.totalorder %v1733, 2
        %v1739 = vxor.u32 %v1722, 2147483648
        %v1740 = vsel %vm1738, %v1739, %v1730
        %v1741 = vsel %vm1734, %v1737, %v1740
        %v1742 = vsel %vm1731, nan, %v1741
        %v1743 = vand.u32 2147483647, %v1277
        %vm1744 = vcmp.le.f32.partialorder %v1743, 0.7853982
        %vm1745 = vcmp.lt.s32.totalorder %v1277, 0
        %v1746 = vand.u32 %v1277, 2139095040
        %v1747 = vshrl.u32 %v1746, 23
        %v1748 = vsub.s32 %v1747, 127
        %v1749 = vand.u32 2147483647, %v1277
        %v1750 = vand.u32 %v1749, 8388607
        %v1751 = vor.u32 %v1750, 8388608
        %v1752 = vsub.s32 0, %v1751
        %v1753 = vadd.s32 %v1748, 1
        %vm1754 = vcmp.gt.s32.totalorder %v1753, 0
        %v1755 = vsel %vm1754, %v1753, 0
        %v1756 = vshrl.u32 %v1755, 5
        %v1757 = vand.u32 %v1755, 31
        %v1758 = vsub.s32 32, %v1757
        %v1759 = vshrl.u32 683565275, %v1758
        %v1760 = vshll.u32 683565275, %v1757
        %v1761 = vshrl.u32 2475754826, %v1758
        %v1762 = vor.u32 %v1760, %v1761
        %v1763 = vshll.u32 2475754826, %v1757
        %v1764 = vshrl.u32 2131351028, %v1758
        %v1765 = vor.u32 %v1763, %v1764
        %v1766 = vshll.u32 2131351028, %v1757
        %v1767 = vshrl.u32 2102212464, %v1758
        %v1768 = vor.u32 %v1766, %v1767
        %v1769 = vshll.u32 2102212464, %v1757
        %v1770 = vshrl.u32 920167782, %v1758
        %v1771 = vor.u32 %v1769, %v1770
        %v1772 = vshll.u32 920167782, %v1757
        %v1773 = vshrl.u32 1326507024, %v1758
        %v1774 = vor.u32 %v1772, %v1773
        %vm1775 = vcmp.lt.s32.totalorder %v1756, 1
        %vm1776 = vcmp.lt.s32.totalorder %v1756, 2
        %vm1777 = vcmp.lt.s32.totalorder %v1756, 3
        %vm1778 = vcmp.lt.s32.totalorder %v1756, 4
        %v1779 = vsel %vm1775, %v1759, %v1762
        %v1780 = vsel %vm1778, %v1768, 2102212464
        %v1781 = vsel %vm1777, %v1765, %v1780
        %v1782 = vsel %vm1776, %v1779, %v1781
        %v1783 = vsel %vm1775, %v1762, %v1765
        %v1784 = vsel %vm1778, %v1771, 920167782
        %v1785 = vsel %vm1777, %v1768, %v1784
        %v1786 = vsel %vm1776, %v1783, %v1785
        %v1787 = vsel %vm1775, %v1765, %v1768
        %v1788 = vsel %vm1778, %v1774, 1326507024
        %v1789 = vsel %vm1777, %v1771, %v1788
        %v1790 = vsel %vm1776, %v1787, %v1789
        %v1791 = vshll.u32 %v1751, 8
        %v1792 = vand.u32 %v1791, 65535
        %v1793 = vshrl.u32 %v1791, 16
        %v1794 = vand.u32 %v1790, 65535
        %v1795 = vshrl.u32 %v1790, 16
        %v1796 = vmul.u32 %v1792, %v1794
        %v1797 = vmul.u32 %v1792, %v1795
        %v1798 = vmul.u32 %v1793, %v1794
        %v1799 = vmul.u32 %v1793, %v1795
        %v1800 = vshll.u32 %v1797, 16
        %v1801 = vshrl.u32 %v1797, 16
        %v1802 = vshll.u32 %v1798, 16
        %v1803 = vshrl.u32 %v1798, 16
        %vm1804 = vc.u32 %v1796, %v1800
        %v1805 = vsel %vm1804, 1, 0
        %v1806 = vadd.s32 %v1796, %v1800
        %v1807 = vadd.s32 %v1799, %v1805
        %vm1808 = vc.u32 %v1806, %v1802
        %v1809 = vsel %vm1808, 1, 0
        %v1810 = vadd.s32 %v1806, %v1802
        %v1811 = vadd.s32 %v1807, %v1809
        %v1812 = vadd.s32 %v1811, %v1801
        %v1813 = vadd.s32 %v1812, %v1803
        %v1814 = vand.u32 %v1791, 65535
        %v1815 = vshrl.u32 %v1791, 16
        %v1816 = vand.u32 %v1786, 65535
        %v1817 = vshrl.u32 %v1786, 16
        %v1818 = vmul.u32 %v1814, %v1816
        %v1819 = vmul.u32 %v1814, %v1817
        %v1820 = vmul.u32 %v1815, %v1816
        %v1821 = vmul.u32 %v1815, %v1817
        %v1822 = vshll.u32 %v1819, 16
        %v1823 = vshrl.u32 %v1819, 16
        %v1824 = vshll.u32 %v1820, 16
        %v1825 = vshrl.u32 %v1820, 16
        %vm1826 = vc.u32 %v1818, %v1822
        %v1827 = vsel %vm1826, 1, 0
        %v1828 = vadd.s32 %v1818, %v1822
        %v1829 = vadd.s32 %v1821, %v1827
        %vm1830 = vc.u32 %v1828, %v1824
        %v1831 = vsel %vm1830, 1, 0
        %v1832 = vadd.s32 %v1828, %v1824
        %v1833 = vadd.s32 %v1829, %v1831
        %v1834 = vadd.s32 %v1833, %v1823
        %v1835 = vadd.s32 %v1834, %v1825
        %v1836 = vmul.u32 %v1791, %v1782
        %v1837 = vadd.s32 %v1813, %v1832
        %vm1838 = vc.u32 %v1813, %v1832
        %v1839 = vadd.s32 %v1835, 1
        %v1840 = vsel %vm1838, %v1839, %v1835
        %v1841 = vadd.s32 %v1836, %v1840
        %v1842 = vadd.s32 %v1841, 536870912
        %v1843 = vshrl.u32 %v1842, 30
        %v1844 = vshll.u32 %v1843, 30
        %v1845 = vsub.s32 %v1841, %v1844
        %vm1846 = vcmp.lt.s32.totalorder %v1845, 0
        %v1847 = vsub.s32 0, %v1845
        %v1848 = vsel %vm1846, %v1847, %v1845
        %v1849 = vclz %v1848
        %v1850 = vsub.s32 %v1849, 2
        %vm1851 = vcmp.gt.s32.totalorder 0, %v1850
        %v1852 = vsel %vm1851, 0, %v1850
        %v1853 = vsub.s32 32, %v1852
        %v1854 = vshll.u32 %v1845, %v1852
        %v1855 = vshrl.u32 %v1837, %v1853
        %v1856 = vor.u32 %v1854, %v1855
        %v1857 = vsub.s32 4294967266, %v1852
        %v1858 = vadd.s32 %v1857, 127
        %v1859 = vshll.u32 %v1858, 23
        %v1860 = vor.u32 4788187, %v1859
        %v1861 = vand.u32 2147483647, %v1860
        %v1863 = vcvt.s32.f32 %v1856
        %v1864 = vmul.f32 %v1863, %v1861
        %v1865 = vxor.u32 %v1864, 2147483648
        %v1866 = vsel %vm1745, %v1865, %v1864
        %v1867 = vsub.s32 4, %v1843
        %v1868 = vsel %vm1745, %v1867, %v1843
        %v1869 = vsel %vm1744, %v1277, %v1866
        %v1870 = vsel %vm1744, 0, %v1868
        %v1871 = vmul.f32 %v1869, %v1869
        %v1872 = vmul.f32 %v1871, -0.001358992
        %v1873 = vadd.f32 %v1872, 0.041655596
        %v1874 = vmul.f32 %v1871, %v1873
        %v1875 = vadd.f32 %v1874, -0.4999988
        %v1876 = vmul.f32 %v1871, %v1875
        %v1877 = vadd.f32 1.0, %v1876
        %v1878 = vmul.f32 %v1869, %v1869
        %v1879 = vmul.f32 %v1878, -0.00019511016
        %v1880 = vadd.f32 %v1879, 0.008332121
        %v1881 = vmul.f32 %v1878, %v1880
        %v1882 = vadd.f32 %v1881, -0.16666654
        %v1883 = vmul.f32 %v1878, %v1882
        %v1884 = vadd.f32 %v1883, 1.0
        %v1885 = vmul.f32 %v1884, %v1869
        %vm1886 = vweird.f32 %v1277
        %v1887 = vadd.s32 %v1870, 3
        %v1888 = vand.u32 %v1887, 3
        %vm1889 = vcmp.lt.s32.totalorder %v1888, 2
        %vm1890 = vcmp.eq.s32.totalorder %v1888, 0
        %v1891 = vxor.u32 %v1885, 2147483648
        %v1892 = vsel %vm1890, %v1877, %v1891
        %vm1893 = vcmp.eq.s32.totalorder %v1888, 2
        %v1894 = vxor.u32 %v1877, 2147483648
        %v1895 = vsel %vm1893, %v1894, %v1885
        %v1896 = vsel %vm1889, %v1892, %v1895
        %v1897 = vsel %vm1886, nan, %v1896
        %v1898 = vmul.f32 %v1256, %v1742
        %v1899 = vmul.f32 %v1256, %v1897
        %v1900 = vadd.f32 %v1586, %v1898
        %v1901 = vadd.f32 %v1587, %v1899
        %v1902 = vmul.f32 %v1273, %v1900
        %v1903 = vmul.f32 %v1275, %v1901
        %v1904 = vsub.f32 %v281, 8.0
        %v1905 = vmul.f32 %v290, %v1904
        %v1906 = vmul.f32 %v1905, 1.442695
        %v1907 = vpow.pop %v1906
        %v1908 = vmul.f32 %v297, %v1904
        %v1909 = vand.u32 2147483647, %v1908
        %vm1910 = vcmp.le.f32.partialorder %v1909, 0.7853982
        %vm1911 = vcmp.lt.s32.totalorder %v1908, 0
        %v1912 = vand.u32 %v1908, 2139095040
        %v1913 = vshrl.u32 %v1912, 23
        %v1914 = vsub.s32 %v1913, 127
        %v1915 = vand.u32 2147483647, %v1908
        %v1916 = vand.u32 %v1915, 8388607
        %v1917 = vor.u32 %v1916, 8388608
        %v1918 = vsub.s32 0, %v1917
        %v1919 = vadd.s32 %v1914, 1
        %vm1920 = vcmp.gt.s32.totalorder %v1919, 0
        %v1921 = vsel %vm1920, %v1919, 0
        %v1922 = vshrl.u32 %v1921, 5
        %v1923 = vand.u32 %v1921, 31
        %v1924 = vsub.s32 32, %v1923
        %v1925 = vshrl.u32 683565275, %v1924
        %v1926 = vshll.u32 683565275, %v1923
        %v1927 = vshrl.u32 2475754826, %v1924
        %v1928 = vor.u32 %v1926, %v1927
        %v1929 = vshll.u32 2475754826, %v1923
        %v1930 = vshrl.u32 2131351028, %v1924
        %v1931 = vor.u32 %v1929, %v1930
        %v1932 = vshll.u32 2131351028, %v1923
        %v1933 = vshrl.u32 2102212464, %v1924
        %v1934 = vor.u32 %v1932, %v1933
        %v1935 = vshll.u32 2102212464, %v1923
        %v1936 = vshrl.u32 920167782, %v1924
        %v1937 = vor.u32 %v1935, %v1936
        %v1938 = vshll.u32 920167782, %v1923
        %v1939 = vshrl.u32 1326507024, %v1924
        %v1940 = vor.u32 %v1938, %v1939
        %vm1941 = vcmp.lt.s32.totalorder %v1922, 1
        %vm1942 = vcmp.lt.s32.totalorder %v1922, 2
        %vm1943 = vcmp.lt.s32.totalorder %v1922, 3
        %vm1944 = vcmp.lt.s32.totalorder %v1922, 4
        %v1945 = vsel %vm1941, %v1925, %v1928
        %v1946 = vsel %vm1944, %v1934, 2102212464
        %v1947 = vsel %vm1943, %v1931, %v1946
        %v1948 = vsel %vm1942, %v1945, %v1947
        %v1949 = vsel %vm1941, %v1928, %v1931
        %v1950 = vsel %vm1944, %v1937, 920167782
        %v1951 = vsel %vm1943, %v1934, %v1950
        %v1952 = vsel %vm1942, %v1949, %v1951
        %v1953 = vsel %vm1941, %v1931, %v1934
        %v1954 = vsel %vm1944, %v1940, 1326507024
        %v1955 = vsel %vm1943, %v1937, %v1954
        %v1956 = vsel %vm1942, %v1953, %v1955
        %v1957 = vshll.u32 %v1917, 8
        %v1958 = vand.u32 %v1957, 65535
        %v1959 = vshrl.u32 %v1957, 16
        %v1960 = vand.u32 %v1956, 65535
        %v1961 = vshrl.u32 %v1956, 16
        %v1962 = vmul.u32 %v1958, %v1960
        %v1963 = vmul.u32 %v1958, %v1961
        %v1964 = vmul.u32 %v1959, %v1960
        %v1965 = vmul.u32 %v1959, %v1961
        %v1966 = vshll.u32 %v1963, 16
        %v1967 = vshrl.u32 %v1963, 16
        %v1968 = vshll.u32 %v1964, 16
        %v1969 = vshrl.u32 %v1964, 16
        %vm1970 = vc.u32 %v1962, %v1966
        %v1971 = vsel %vm1970, 1, 0
        %v1972 = vadd.s32 %v1962, %v1966
        %v1973 = vadd.s32 %v1965, %v1971
        %vm1974 = vc.u32 %v1972, %v1968
        %v1975 = vsel %vm1974, 1, 0
        %v1976 = vadd.s32 %v1972, %v1968
        %v1977 = vadd.s32 %v1973, %v1975
        %v1978 = vadd.s32 %v1977, %v1967
        %v1979 = vadd.s32 %v1978, %v1969
        %v1980 = vand.u32 %v1957, 65535
        %v1981 = vshrl.u32 %v1957, 16
        %v1982 = vand.u32 %v1952, 65535
        %v1983 = vshrl.u32 %v1952, 16
        %v1984 = vmul.u32 %v1980, %v1982
        %v1985 = vmul.u32 %v1980, %v1983
        %v1986 = vmul.u32 %v1981, %v1982
        %v1987 = vmul.u32 %v1981, %v1983
        %v1988 = vshll.u32 %v1985, 16
        %v1989 = vshrl.u32 %v1985, 16
        %v1990 = vshll.u32 %v1986, 16
        %v1991 = vshrl.u32 %v1986, 16
        %vm1992 = vc.u32 %v1984, %v1988
        %v1993 = vsel %vm1992, 1, 0
        %v1994 = vadd.s32 %v1984, %v1988
        %v1995 = vadd.s32 %v1987, %v1993
        %vm1996 = vc.u32 %v1994, %v1990
        %v1997 = vsel %vm1996, 1, 0
        %v1998 = vadd.s32 %v1994, %v1990
        %v1999 = vadd.s32 %v1995, %v1997
        %v2000 = vadd.s32 %v1999, %v1989
        %v2001 = vadd.s32 %v2000, %v1991
        %v2002 = vmul.u32 %v1957, %v1948
        %v2003 = vadd.s32 %v1979, %v1998
        %vm2004 = vc.u32 %v1979, %v1998
        %v2005 = vadd.s32 %v2001, 1
        %v2006 = vsel %vm2004, %v2005, %v2001
        %v2007 = vadd.s32 %v2002, %v2006
        %v2008 = vadd.s32 %v2007, 536870912
        %v2009 = vshrl.u32 %v2008, 30
        %v2010 = vshll.u32 %v2009, 30
        %v2011 = vsub.s32 %v2007, %v2010
        %vm2012 = vcmp.lt.s32.totalorder %v2011, 0
        %v2013 = vsub.s32 0, %v2011
        %v2014 = vsel %vm2012, %v2013, %v2011
        %v2015 = vclz %v2014
        %v2016 = vsub.s32 %v2015, 2
        %vm2017 = vcmp.gt.s32.totalorder 0, %v2016
        %v2018 = vsel %vm2017, 0, %v2016
        %v2019 = vsub.s32 32, %v2018
        %v2020 = vshll.u32 %v2011, %v2018
        %v2021 = vshrl.u32 %v2003, %v2019
        %v2022 = vor.u32 %v2020, %v2021
        %v2023 = vsub.s32 4294967266, %v2018
        %v2024 = vadd.s32 %v2023, 127
        %v2025 = vshll.u32 %v2024, 23
        %v2026 = vor.u32 4788187, %v2025
        %v2027 = vand.u32 2147483647, %v2026
        %v2029 = vcvt.s32.f32 %v2022
        %v2030 = vmul.f32 %v2029, %v2027
        %v2031 = vxor.u32 %v2030, 2147483648
        %v2032 = vsel %vm1911, %v2031, %v2030
        %v2033 = vsub.s32 4, %v2009
        %v2034 = vsel %vm1911, %v2033, %v2009
        %v2035 = vsel %vm1910, %v1908, %v2032
        %v2036 = vsel %vm1910, 0, %v2034
        %v2037 = vmul.f32 %v2035, %v2035
        %v2038 = vmul.f32 %v2037, -0.001358992
        %v2039 = vadd.f32 %v2038, 0.041655596
        %v2040 = vmul.f32 %v2037, %v2039
        %v2041 = vadd.f32 %v2040, -0.4999988
        %v2042 = vmul.f32 %v2037, %v2041
        %v2043 = vadd.f32 1.0, %v2042
        %v2044 = vmul.f32 %v2035, %v2035
        %v2045 = vmul.f32 %v2044, -0.00019511016
        %v2046 = vadd.f32 %v2045, 0.008332121
        %v2047 = vmul.f32 %v2044, %v2046
        %v2048 = vadd.f32 %v2047, -0.16666654
        %v2049 = vmul.f32 %v2044, %v2048
        %v2050 = vadd.f32 %v2049, 1.0
        %v2051 = vmul.f32 %v2050, %v2035
        %vm2052 = vweird.f32 %v1908
        %v2053 = vand.u32 %v2036, 3
        %vm2054 = vcmp.lt.s32.totalorder %v2053, 2
        %vm2055 = vcmp.eq.s32.totalorder %v2053, 0
        %v2056 = vxor.u32 %v2051, 2147483648
        %v2057 = vsel %vm2055, %v2043, %v2056
        %vm2058 = vcmp.eq.s32.totalorder %v2053, 2
        %v2059 = vxor.u32 %v2043, 2147483648
        %v2060 = vsel %vm2058, %v2059, %v2051
        %v2061 = vsel %vm2054, %v2057, %v2060
        %v2062 = vsel %vm2052, nan, %v2061
        %v2063 = vmul.f32 %v456, %v2062
        %v2064 = vand.u32 2147483647, %v1908
        %vm2065 = vcmp.le.f32.partialorder %v2064, 0.7853982
        %vm2066 = vcmp.lt.s32.totalorder %v1908, 0
        %v2067 = vand.u32 %v1908, 2139095040
        %v2068 = vshrl.u32 %v2067, 23
        %v2069 = vsub.s32 %v2068, 127
        %v2070 = vand.u32 2147483647, %v1908
        %v2071 = vand.u32 %v2070, 8388607
        %v2072 = vor.u32 %v2071, 8388608
        %v2073 = vsub.s32 0, %v2072
        %v2074 = vadd.s32 %v2069, 1
        %vm2075 = vcmp.gt.s32.totalorder %v2074, 0
        %v2076 = vsel %vm2075, %v2074, 0
        %v2077 = vshrl.u32 %v2076, 5
        %v2078 = vand.u32 %v2076, 31
        %v2079 = vsub.s32 32, %v2078
        %v2080 = vshrl.u32 683565275, %v2079
        %v2081 = vshll.u32 683565275, %v2078
        %v2082 = vshrl.u32 2475754826, %v2079
        %v2083 = vor.u32 %v2081, %v2082
        %v2084 = vshll.u32 2475754826, %v2078
        %v2085 = vshrl.u32 2131351028, %v2079
        %v2086 = vor.u32 %v2084, %v2085
        %v2087 = vshll.u32 2131351028, %v2078
        %v2088 = vshrl.u32 2102212464, %v2079
        %v2089 = vor.u32 %v2087, %v2088
        %v2090 = vshll.u32 2102212464, %v2078
        %v2091 = vshrl.u32 920167782, %v2079
        %v2092 = vor.u32 %v2090, %v2091
        %v2093 = vshll.u32 920167782, %v2078
        %v2094 = vshrl.u32 1326507024, %v2079
        %v2095 = vor.u32 %v2093, %v2094
        %vm2096 = vcmp.lt.s32.totalorder %v2077, 1
        %vm2097 = vcmp.lt.s32.totalorder %v2077, 2
        %vm2098 = vcmp.lt.s32.totalorder %v2077, 3
        %vm2099 = vcmp.lt.s32.totalorder %v2077, 4
        %v2100 = vsel %vm2096, %v2080, %v2083
        %v2101 = vsel %vm2099, %v2089, 2102212464
        %v2102 = vsel %vm2098, %v2086, %v2101
        %v2103 = vsel %vm2097, %v2100, %v2102
        %v2104 = vsel %vm2096, %v2083, %v2086
        %v2105 = vsel %vm2099, %v2092, 920167782
        %v2106 = vsel %vm2098, %v2089, %v2105
        %v2107 = vsel %vm2097, %v2104, %v2106
        %v2108 = vsel %vm2096, %v2086, %v2089
        %v2109 = vsel %vm2099, %v2095, 1326507024
        %v2110 = vsel %vm2098, %v2092, %v2109
        %v2111 = vsel %vm2097, %v2108, %v2110
        %v2112 = vshll.u32 %v2072, 8
        %v2113 = vand.u32 %v2112, 65535
        %v2114 = vshrl.u32 %v2112, 16
        %v2115 = vand.u32 %v2111, 65535
        %v2116 = vshrl.u32 %v2111, 16
        %v2117 = vmul.u32 %v2113, %v2115
        %v2118 = vmul.u32 %v2113, %v2116
        %v2119 = vmul.u32 %v2114, %v2115
        %v2120 = vmul.u32 %v2114, %v2116
        %v2121 = vshll.u32 %v2118, 16
        %v2122 = vshrl.u32 %v2118, 16
        %v2123 = vshll.u32 %v2119, 16
        %v2124 = vshrl.u32 %v2119, 16
        %vm2125 = vc.u32 %v2117, %v2121
        %v2126 = vsel %vm2125, 1, 0
        %v2127 = vadd.s32 %v2117, %v2121
        %v2128 = vadd.s32 %v2120, %v2126
        %vm2129 = vc.u32 %v2127, %v2123
        %v2130 = vsel %vm2129, 1, 0
        %v2131 = vadd.s32 %v2127, %v2123
        %v2132 = vadd.s32 %v2128, %v2130
        %v2133 = vadd.s32 %v2132, %v2122
        %v2134 = vadd.s32 %v2133, %v2124
        %v2135 = vand.u32 %v2112, 65535
        %v2136 = vshrl.u32 %v2112, 16
        %v2137 = vand.u32 %v2107, 65535
        %v2138 = vshrl.u32 %v2107, 16
        %v2139 = vmul.u32 %v2135, %v2137
        %v2140 = vmul.u32 %v2135, %v2138
        %v2141 = vmul.u32 %v2136, %v2137
        %v2142 = vmul.u32 %v2136, %v2138
        %v2143 = vshll.u32 %v2140, 16
        %v2144 = vshrl.u32 %v2140, 16
        %v2145 = vshll.u32 %v2141, 16
        %v2146 = vshrl.u32 %v2141, 16
        %vm2147 = vc.u32 %v2139, %v2143
        %v2148 = vsel %vm2147, 1, 0
        %v2149 = vadd.s32 %v2139, %v2143
        %v2150 = vadd.s32 %v2142, %v2148
        %vm2151 = vc.u32 %v2149, %v2145
        %v2152 = vsel %vm2151, 1, 0
        %v2153 = vadd.s32 %v2149, %v2145
        %v2154 = vadd.s32 %v2150, %v2152
        %v2155 = vadd.s32 %v2154, %v2144
        %v2156 = vadd.s32 %v2155, %v2146
        %v2157 = vmul.u32 %v2112, %v2103
        %v2158 = vadd.s32 %v2134, %v2153
        %vm2159 = vc.u32 %v2134, %v2153
        %v2160 = vadd.s32 %v2156, 1
        %v2161 = vsel %vm2159, %v2160, %v2156
        %v2162 = vadd.s32 %v2157, %v2161
        %v2163 = vadd.s32 %v2162, 536870912
        %v2164 = vshrl.u32 %v2163, 30
        %v2165 = vshll.u32 %v2164, 30
        %v2166 = vsub.s32 %v2162, %v2165
        %vm2167 = vcmp.lt.s32.totalorder %v2166, 0
        %v2168 = vsub.s32 0, %v2166
        %v2169 = vsel %vm2167, %v2168, %v2166
        %v2170 = vclz %v2169
        %v2171 = vsub.s32 %v2170, 2
        %vm2172 = vcmp.gt.s32.totalorder 0, %v2171
        %v2173 = vsel %vm2172, 0, %v2171
        %v2174 = vsub.s32 32, %v2173
        %v2175 = vshll.u32 %v2166, %v2173
        %v2176 = vshrl.u32 %v2158, %v2174
        %v2177 = vor.u32 %v2175, %v2176
        %v2178 = vsub.s32 4294967266, %v2173
        %v2179 = vadd.s32 %v2178, 127
        %v2180 = vshll.u32 %v2179, 23
        %v2181 = vor.u32 4788187, %v2180
        %v2182 = vand.u32 2147483647, %v2181
        %v2184 = vcvt.s32.f32 %v2177
        %v2185 = vmul.f32 %v2184, %v2182
        %v2186 = vxor.u32 %v2185, 2147483648
        %v2187 = vsel %vm2066, %v2186, %v2185
        %v2188 = vsub.s32 4, %v2164
        %v2189 = vsel %vm2066, %v2188, %v2164
        %v2190 = vsel %vm2065, %v1908, %v2187
        %v2191 = vsel %vm2065, 0, %v2189
        %v2192 = vmul.f32 %v2190, %v2190
        %v2193 = vmul.f32 %v2192, -0.001358992
        %v2194 = vadd.f32 %v2193, 0.041655596
        %v2195 = vmul.f32 %v2192, %v2194
        %v2196 = vadd.f32 %v2195, -0.4999988
        %v2197 = vmul.f32 %v2192, %v2196
        %v2198 = vadd.f32 1.0, %v2197
        %v2199 = vmul.f32 %v2190, %v2190
        %v2200 = vmul.f32 %v2199, -0.00019511016
        %v2201 = vadd.f32 %v2200, 0.008332121
        %v2202 = vmul.f32 %v2199, %v2201
        %v2203 = vadd.f32 %v2202, -0.16666654
        %v2204 = vmul.f32 %v2199, %v2203
        %v2205 = vadd.f32 %v2204, 1.0
        %v2206 = vmul.f32 %v2205, %v2190
        %vm2207 = vweird.f32 %v1908
        %v2208 = vadd.s32 %v2191, 3
        %v2209 = vand.u32 %v2208, 3
        %vm2210 = vcmp.lt.s32.totalorder %v2209, 2
        %vm2211 = vcmp.eq.s32.totalorder %v2209, 0
        %v2212 = vxor.u32 %v2206, 2147483648
        %v2213 = vsel %vm2211, %v2198, %v2212
        %vm2214 = vcmp.eq.s32.totalorder %v2209, 2
        %v2215 = vxor.u32 %v2198, 2147483648
        %v2216 = vsel %vm2214, %v2215, %v2206
        %v2217 = vsel %vm2210, %v2213, %v2216
        %v2218 = vsel %vm2207, nan, %v2217
        %v2219 = vmul.f32 %v616, %v2218
        %v2220 = vadd.f32 %v2063, %v2219
        %v2221 = vmul.f32 %v1907, %v2220
        %vm2222 = vcmask 64512
        %v2224 = vsel %vm2222, %v1902, 0
        %v2227 = vsel %vm2222, %v1903, 0
        %2229 = vmatpush.msra.mxu0 0.0
        %2230 = vmatpush.msra.mxu0 0.0
        %2231 = vmatpush.msra.mxu0 0.0
        %2232 = vmatpush.msra.mxu0 0.0
        %2233 = vmatpush.msra.mxu0 0.0
        %2234 = vmatpush.msra.mxu0 0.0
        %2235 = vmatpush.msra.mxu0 0.0
        %2236 = vmatpush.msra.mxu0 0.0
        %2237 = vmatpush.msra.mxu0 0.0
        %2238 = vmatpush.msra.mxu0 0.0
        %2239 = vmatpush.msra.mxu0 0.0
        %2240 = vmatpush.msra.mxu0 0.0
        %2241 = vmatpush.msra.mxu0 0.0
        %2242 = vmatpush.msra.mxu0 0.0
        %2243 = vmatpush.msra.mxu0 0.0
        %2244 = vmatpush.msra.mxu0 %v2221
        %2245 = vmatmul.f32.gmra.mxu0 %v2224
        %v2246 = vpop.f32.mrf.mxu0
        %v2247 = vadd.f32 0.0, %v2246
        %2248 = vmatmul.f32.gmra.mxu0 %v2227
        %v2249 = vpop.f32.mrf.mxu0
        %v2250 = vadd.f32 0.0, %v2249
        %2251 = vdwg.mxu0
        %vm2252 = vcmp.ge.f32.partialorder %v281, %v285
        %vm2253 = vcmp.ge.f32.partialorder %v281, %v286
        %v2254 = vsel %vm2252, %v2247, 0.0
        %v2255 = vsel %vm2253, %v2250, 0.0
        %v2256 = vpack.c.bf16 %v2254, %v2254
        %v2257 = vpack.c.bf16 %v2255, %v2255
        %vm2258 = vcmask 125952
        %2259 = vst.msk [vmem:[#allocation2] sm:$0xf] %vm2258, %v2256
        %2260 = vst.msk [vmem:[#allocation2 + $0x4] sm:$0xf] %vm2258, %v2257
        %vm2261 = vcmask 58368
        %2262 = vst.msk [vmem:[#allocation5] sm:$0x3] %vm2261, 0.0
      $region40: #{s4d_forward.1} parent=35 // pred_fallthru
        _
      %v2263 = vld [vmem:[%s264] sm:$0x1]
      %v2264 = vld [vmem:[#allocation5] sm:$0x3]
      %v2265 = vld [vmem:[%s250] sm:$0xff]
      %v2266 = vld [vmem:[#allocation2] sm:$0xf]
      %v2267 = vld [vmem:[#allocation2 + $0x4] sm:$0xf]
      %v2268 = vld [vmem:[#allocation3] sm:$0xff]
      %vm2269 = vcmask 64512
      %v2271 = vsel %vm2269, %v2264, 0
      %2273 = vmatpush.msra.mxu0 0.0
      %2274 = vmatpush.msra.mxu0 0.0
      %2275 = vmatpush.msra.mxu0 0.0
      %2276 = vmatpush.msra.mxu0 0.0
      %2277 = vmatpush.msra.mxu0 0.0
      %2278 = vmatpush.msra.mxu0 0.0
      %2279 = vmatpush.msra.mxu0 0.0
      %2280 = vmatpush.msra.mxu0 0.0
      %2281 = vmatpush.msra.mxu0 0.0
      %2282 = vmatpush.msra.mxu0 0.0
      %2283 = vmatpush.msra.mxu0 0.0
      %2284 = vmatpush.msra.mxu0 0.0
      %2285 = vmatpush.msra.mxu0 0.0
      %2286 = vmatpush.msra.mxu0 0.0
      %2287 = vmatpush.msra.mxu0 0.0
      %2288 = vmatpush.msra.mxu0 %v2268
      %2289 = vmatmul.f32.gmra.mxu0 %v2271
      %v2290 = vpop.f32.mrf.mxu0
      %v2291 = vadd.f32 0.0, %v2290
      %2292 = vdwg.mxu0
      %v2295 = vunpack.c.l.b16 %v2266
      %v2296 = vunpack.c.l.b16 %v2267
      %v2297 = vpack.c.b16 %v2296, %v2295
      %vm2299 = vcmask 130048
      %v2301 = vsel %vm2299, %v2263, 0
      %2303 = vmatpush.bf16.msra.mxu0 0
      %2304 = vmatpush.bf16.msra.mxu0 0
      %2305 = vmatpush.bf16.msra.mxu0 0
      %2306 = vmatpush.bf16.msra.mxu0 0
      %2307 = vmatpush.bf16.msra.mxu0 0
      %2308 = vmatpush.bf16.msra.mxu0 0
      %2309 = vmatpush.bf16.msra.mxu0 0
      %2310 = vmatpush.bf16.msra.mxu0 %v2297
      %2311 = vmatmul.bf16.gmra.mxu0 %v2301
      %v2312 = vpop.f32.mrf.mxu0
      %v2313 = vadd.f32 %v2291, %v2312
      %v2314 = vpop.f32.mrf.mxu0
      %2315 = vdwg.mxu0
      %v2316 = vunpack.c.l.bf16 %v2263
      %2318 = vrot.lane.b32.xlu0 %v2265, 124
      %v2319 = vpop.permute.xlu0 %2318
      %s2320 = vtos %v2319
      %v2321 = vstv %s2320
      %v2323 = vmul.f32 %v2321, %v2316
      %v2324 = vadd.f32 %v2313, %v2323
      %vm2325 = vcmask 123904
      %2326 = vst.msk [vmem:[%s271] sm:$0x3] %vm2325, %v2324
      %v2327 = vld [vmem:[%s258] sm:$0xff]
      %v2328 = vld [vmem:[#allocation4] sm:$0xf]
      %v2329 = vld [vmem:[#allocation4 + $0x4] sm:$0xf]
      %v2332 = vunpack.c.l.b16 %v2328
      %v2333 = vunpack.c.l.b16 %v2329
      %v2334 = vpack.c.b16 %v2333, %v2332
      %2336 = vmatpush.bf16.msra.mxu0 0
      %2337 = vmatpush.bf16.msra.mxu0 0
      %2338 = vmatpush.bf16.msra.mxu0 0
      %2339 = vmatpush.bf16.msra.mxu0 0
      %2340 = vmatpush.bf16.msra.mxu0 0
      %2341 = vmatpush.bf16.msra.mxu0 0
      %2342 = vmatpush.bf16.msra.mxu0 0
      %2343 = vmatpush.bf16.msra.mxu0 %v2334
      %2344 = vmatmul.bf16.gmra.mxu0 %v2301
      %v2345 = vpop.f32.mrf.mxu0
      %v2346 = vadd.f32 0.0, %v2345
      %v2347 = vpop.f32.mrf.mxu0
      %2348 = vdwg.mxu0
      %2349 = vmatpush.msra.mxu0 0.0
      %2350 = vmatpush.msra.mxu0 0.0
      %2351 = vmatpush.msra.mxu0 0.0
      %2352 = vmatpush.msra.mxu0 0.0
      %2353 = vmatpush.msra.mxu0 0.0
      %2354 = vmatpush.msra.mxu0 0.0
      %2355 = vmatpush.msra.mxu0 0.0
      %2356 = vmatpush.msra.mxu0 0.0
      %2357 = vmatpush.msra.mxu0 0.0
      %2358 = vmatpush.msra.mxu0 0.0
      %2359 = vmatpush.msra.mxu0 0.0
      %2360 = vmatpush.msra.mxu0 0.0
      %2361 = vmatpush.msra.mxu0 0.0
      %2362 = vmatpush.msra.mxu0 0.0
      %2363 = vmatpush.msra.mxu0 0.0
      %2364 = vmatpush.msra.mxu0 %v2327
      %2365 = vmatmul.f32.gmra.mxu0 %v2271
      %v2366 = vpop.f32.mrf.mxu0
      %v2367 = vadd.f32 %v2346, %v2366
      %2368 = vdwg.mxu0
      %vm2369 = vcmask 58368
      %2370 = vst.msk [vmem:[#allocation5] sm:$0x3] %vm2369, %v2367
      %p2371 = scmp.lt.s32.totalorder %s19, 7
      %s2372 = scalar_select %p2371, %s19, 7
      %p2373 = scmp.lt.s32.totalorder %s20, 0
      %s2374 = scalar_select %p2373, %s20, 0
      %s2375 = sadd.s32 %s2374, %s2372
      %s2376 = smul.addr %s2375, 2
      %s2377 = scalar_lea.vmem %s4, %s2376
      // Predicated region
      $region41: #{s4d_forward.1} parent=35 // pred_check
        %p2378 = pneg %p153
      $region42: #{s4d_forward.1} parent=35 // pred_check_branch
        %2380 = sbr.rel (%p2378) target = $region44
      $region43: #{s4d_forward.1} parent=35 // pred_region
        _
      $region44: #{s4d_forward.1} parent=35 // pred_fallthru
        _
    $region36: #{s4d_forward.1} parent=5 // pred_fallthru
      _
    %p2381 = scmp.le.s32.totalorder 2, %s10
    // Predicated region
    $region45: #{s4d_forward.1} parent=5 // pred_check
      %p2382 = pneg %p2381
    $region46: #{s4d_forward.1} parent=5 // pred_check_branch
      %2384 = sbr.rel (%p2382) target = $region48
    $region47: #{s4d_forward.1} parent=5 // pred_region
      %s2385 = ssub.s32 %s10, 2
      // Predicated region
      $region49: #{s4d_forward.1} parent=47 // pred_check
        %p2386 = pneg %p159
      $region50: #{s4d_forward.1} parent=47 // pred_check_branch
        %2388 = sbr.rel (%p2386) target = $region52
      $region51: #{s4d_forward.1} parent=47 // pred_region
        %p2389 = scmp.lt.s32.totalorder %s21, 7
        %s2390 = scalar_select %p2389, %s21, 7
        %p2391 = scmp.lt.s32.totalorder %s22, 0
        %s2392 = scalar_select %p2391, %s22, 0
        %s2393 = sadd.s32 %s2392, %s2390
        %s2394 = smul.addr %s2393, 2
        %s2395 = scalar_lea.vmem %s4, %s2394
      $region52: #{s4d_forward.1} parent=47 // pred_fallthru
        _
    $region48: #{s4d_forward.1} parent=5 // pred_fallthru
      _
  $region6: #{s4d_forward.1} parent=0 // loop_footer
    %s14 = sadd.s32 1, %s10
  $region7: #{s4d_forward.1} parent=0 // loop_footer_branch
    %9 = sbr.rel target = $region3
  $region8: #{s4d_forward.1} parent=0 // loop_exit
    _

</llo_original>
